<compile_context>
chip_gen: v7x
topology: tpu7x:2x2x1
jax: 0.10.0
libtpu: 0.0.40
codegen_flags: <defaults>
</compile_context>

<pallas_src>
import functools

import jax
import jax.numpy as jnp
from jax.experimental import pallas as pl
from jax.experimental.pallas import tpu as pltpu


def _round_up(x: int, m: int) -> int:
    return ((x + m - 1) // m) * m


def _vmem_capacity_bytes() -> int:
    """Generation-aware VMEM capacity (falls back to the v7x 64 MiB floor)."""
    try:
        cap = getattr(pltpu.get_tpu_info(), "vmem_capacity_bytes", None)
        if cap:
            return int(cap)
    except Exception:
        pass
    return 64 * 1024 * 1024


# ----------------------------- Pallas kernel -------------------------------

def _mlp_kernel(*refs, n_layers: int, compute_dtype):
    """Fused full-MLP forward on one (TB, f_in) batch tile.

    refs = (x_ref, w0, b0, w1, b1, ..., w_{n-1}, b_{n-1}, o_ref).
    Weights arrive already cast to `compute_dtype` (done once, host side);
    biases are f32.  Matmuls run on the MXU in `compute_dtype` with f32
    accumulation; bias-add and ELU stay in f32; inter-layer activations are
    carried in `compute_dtype`.
    """
    x_ref = refs[0]
    o_ref = refs[-1]
    wb = refs[1:-1]

    h = x_ref[...].astype(compute_dtype)
    for i in range(n_layers):
        w = wb[2 * i][...]            # (f_in, f_out), compute_dtype
        b = wb[2 * i + 1][...]        # (1, f_out) f32, broadcasts over rows
        acc = jnp.dot(h, w, preferred_element_type=jnp.float32) + b
        if i < n_layers - 1:
            # ELU(alpha=1): x if x > 0 else exp(x) - 1   (exp -> EUP slot).
            acc = jnp.where(acc > 0, acc,
                            jnp.exp(jnp.minimum(acc, 0.0)) - 1.0)
            h = acc.astype(compute_dtype)
        else:
            h = acc
    o_ref[...] = h.astype(o_ref.dtype)


# ----------------------------- Decoder wrapper ------------------------------

def decoder_forward(params, x: jax.Array, *, tb: int = 1024,
                    compute_dtype=jnp.bfloat16,
                    weight_buffering: int | None = 1) -> jax.Array:
    """Full MLP forward as a single fused Pallas call.

    params: list of (w, b) with w shaped (f_in, f_out), b shaped (f_out,)
    x:      (B, din + r)
    """
    n_layers = len(params)
    B, f_in0 = x.shape
    hidden = params[0][0].shape[1]
    dout = params[-1][0].shape[1]
    out_dtype = x.dtype
    w_itemsize = jnp.dtype(compute_dtype).itemsize
    f32_itemsize = 4

    # ---- lane-dense final layer: zero-pad dout up to a multiple of 128 ----
    dout_pad = _round_up(max(dout, 128), 128)
    w_last, b_last = params[-1]
    w_last = jnp.pad(w_last, ((0, 0), (0, dout_pad - dout)))
    b_last = jnp.pad(b_last, ((0, dout_pad - dout),))
    layer_params = list(params[:-1]) + [(w_last, b_last)]

    # ---- batch tiling: rows padded to >=128 (fills MXU M dimension) -------
    rows = _round_up(max(B, 1), 128)
    tb = max(128, min(_round_up(tb, 128), rows))
    if rows >= 256:
        # Keep >= 2 grid steps so the "parallel" batch axis can shard across
        # v7x's two TensorCores.
        half = max(128, (rows // 2) // 128 * 128)
        tb = min(tb, half)
    B_pad = _round_up(B, tb)
    x_p = jnp.pad(x, ((0, B_pad - B), (0, 0)))
    grid = (B_pad // tb,)

    # ---- weight/bias BlockSpecs: constant index_map, single-buffered -------
    w_spec_kwargs = {}
    if weight_buffering is not None and hasattr(pl, "Buffered"):
        w_spec_kwargs = dict(pipeline_mode=pl.Buffered(weight_buffering))

    flat_args = [x_p]
    in_specs = [pl.BlockSpec((tb, f_in0), lambda i: (i, 0))]
    for (w, b) in layer_params:
        f_in, f_out = w.shape
        flat_args.append(w.astype(compute_dtype))          # cast ONCE, host side
        in_specs.append(pl.BlockSpec((f_in, f_out), lambda i: (0, 0),
                                     **w_spec_kwargs))
        flat_args.append(b.reshape(1, f_out).astype(jnp.float32))
        in_specs.append(pl.BlockSpec((1, f_out), lambda i: (0, 0),
                                     **w_spec_kwargs))
    out_specs = pl.BlockSpec((tb, dout_pad), lambda i: (i, 0))
    out_shape = jax.ShapeDtypeStruct((B_pad, dout_pad), out_dtype)

    # ---- cost estimate ------------------------------------------------------
    flops = 0
    bytes_accessed = (x_p.size * x_p.dtype.itemsize
                      + B_pad * dout_pad * jnp.dtype(out_dtype).itemsize)
    for (w, b) in layer_params:
        flops += 2 * B_pad * w.shape[0] * w.shape[1]
        bytes_accessed += w.size * w_itemsize + b.size * f32_itemsize
    transcendentals = B_pad * hidden * (n_layers - 1)
    cost = pl.CostEstimate(flops=flops, transcendentals=transcendentals,
                           bytes_accessed=bytes_accessed)

    # ---- VMEM budget (double-buffered I/O, single-buffered weights) --------
    wbuf = weight_buffering if w_spec_kwargs else 2
    vmem_bytes = (2 * tb * f_in0 * x_p.dtype.itemsize
                  + 2 * tb * dout_pad * jnp.dtype(out_dtype).itemsize)
    for (w, b) in layer_params:
        vmem_bytes += wbuf * (w.size * w_itemsize + b.size * f32_itemsize)
    vmem_bytes += 4 * tb * max(hidden, dout_pad) * f32_itemsize  # live activations
    vmem_cap = _vmem_capacity_bytes()
    vmem_limit = int(min(max(vmem_bytes + (4 << 20), 32 << 20),
                         vmem_cap - vmem_cap // 8))

    kernel = functools.partial(_mlp_kernel, n_layers=n_layers,
                               compute_dtype=compute_dtype)
    out = pl.pallas_call(
        kernel,
        out_shape=out_shape,
        grid=grid,
        in_specs=in_specs,
        out_specs=out_specs,
        compiler_params=pltpu.CompilerParams(
            dimension_semantics=("parallel",),
            vmem_limit_bytes=vmem_limit,
        ),
        cost_estimate=cost,
    )(*flat_args)

    return out[:B, :dout]


# ----------------------------- params / reference ---------------------------

def init_decoder_params(key, din: int, dout: int, r: int,
                        nlayers: int = 5, beta: int = 512):
    """Deterministic init matching nn.Linear shapes (weights kept as (in, out))."""
    hidden = beta * dout
    dims = [din + r] + [hidden] * (nlayers - 1) + [dout]
    params = []
    for i in range(len(dims) - 1):
        f_in, f_out = dims[i], dims[i + 1]
        key, kw, kb = jax.random.split(key, 3)
        bound = 1.0 / jnp.sqrt(jnp.float32(f_in))
        w = jax.random.uniform(kw, (f_in, f_out), jnp.float32, -bound, bound)
        b = jax.random.uniform(kb, (f_out,), jnp.float32, -bound, bound)
        params.append((w, b))
    return params


def decoder_forward_ref(params, x: jax.Array, compute_dtype=jnp.float32):
    """Pure-JAX reference.  With compute_dtype=bf16 it emulates the kernel's
    mixed-precision arithmetic (bf16 matmul inputs, f32 accumulate/bias/ELU)."""
    n = len(params)
    h = x.astype(compute_dtype)
    for i, (w, b) in enumerate(params):
        acc = jnp.dot(h, w.astype(compute_dtype),
                      preferred_element_type=jnp.float32) + b
        if i < n - 1:
            acc = jnp.where(acc > 0, acc, jnp.exp(jnp.minimum(acc, 0.0)) - 1.0)
            h = acc.astype(compute_dtype)
        else:
            h = acc
    return h.astype(x.dtype)


# --------------------------------- main ------------------------------------

if __name__ == "__main__":
    # Small, forward-consistent shapes: din=2, dout=2, r=6, beta=64 -> hidden=128
    din, dout, r = 2, 2, 6
    nlayers, beta = 5, 64
    batch = 8

    key = jax.random.PRNGKey(0)
    key, kx = jax.random.split(key)
    params = init_decoder_params(key, din, dout, r, nlayers=nlayers, beta=beta)

    # X: |#batch| x |#latent + #input dims|
    x = jax.random.normal(kx, (batch, din + r), jnp.float32)

    def run(weight_buffering):
        fwd = jax.jit(functools.partial(decoder_forward, tb=256,
                                        weight_buffering=weight_buffering))
        return jax.block_until_ready(fwd(params, x))

    try:
        out = run(1)            # single-buffered VMEM-resident weights
    except Exception:           # older JAX without BlockSpec pipeline_mode support
        out = run(None)

    # Tight check vs a reference that emulates the kernel's bf16/f32 mixed
    # precision, plus a loose sanity check vs the pure-f32 forward.
    ref_bf16 = decoder_forward_ref(params, x, compute_dtype=jnp.bfloat16)
    ref_f32 = decoder_forward_ref(params, x, compute_dtype=jnp.float32)

    assert out.shape == (batch, dout), out.shape
    assert jnp.allclose(out, ref_bf16, atol=2e-2, rtol=2e-2), \
        "mismatch vs mixed-precision JAX reference"
    assert jnp.allclose(out, ref_f32, atol=1e-1, rtol=1e-1), \
        "mismatch vs f32 JAX reference"

    print("KERNEL_OK")
</pallas_src>

<mosaic_0001>
module attributes {stable_mosaic.version = 11 : i64} {
  func.func @_mlp_kernel(%arg0: i32, %arg1: memref<128x8xf32, #tpu.memory_space<vmem>>, %arg2: memref<8x128xbf16, #tpu.memory_space<vmem>>, %arg3: memref<1x128xf32, #tpu.memory_space<vmem>>, %arg4: memref<128x128xbf16, #tpu.memory_space<vmem>>, %arg5: memref<1x128xf32, #tpu.memory_space<vmem>>, %arg6: memref<128x128xbf16, #tpu.memory_space<vmem>>, %arg7: memref<1x128xf32, #tpu.memory_space<vmem>>, %arg8: memref<128x128xbf16, #tpu.memory_space<vmem>>, %arg9: memref<1x128xf32, #tpu.memory_space<vmem>>, %arg10: memref<128x128xbf16, #tpu.memory_space<vmem>>, %arg11: memref<1x128xf32, #tpu.memory_space<vmem>>, %arg12: memref<128x128xf32, #tpu.memory_space<vmem>>) attributes {dimension_semantics = [#tpu.dimension_semantics<parallel>], iteration_bounds = array<i64: 1>, scalar_prefetch = 0 : i64, scratch_operands = 0 : i64, tpu.core_type = #tpu.core_type<tc>, window_params = [{transform_indices = @transform_0, window_bounds = array<i64: 128, 8>}, {pipeline_mode = #tpu.pipeline_mode<synchronous>, transform_indices = @transform_1, window_bounds = array<i64: 8, 128>}, {pipeline_mode = #tpu.pipeline_mode<synchronous>, transform_indices = @transform_2, window_bounds = array<i64: 1, 128>}, {pipeline_mode = #tpu.pipeline_mode<synchronous>, transform_indices = @transform_3, window_bounds = array<i64: 128, 128>}, {pipeline_mode = #tpu.pipeline_mode<synchronous>, transform_indices = @transform_4, window_bounds = array<i64: 1, 128>}, {pipeline_mode = #tpu.pipeline_mode<synchronous>, transform_indices = @transform_5, window_bounds = array<i64: 128, 128>}, {pipeline_mode = #tpu.pipeline_mode<synchronous>, transform_indices = @transform_6, window_bounds = array<i64: 1, 128>}, {pipeline_mode = #tpu.pipeline_mode<synchronous>, transform_indices = @transform_7, window_bounds = array<i64: 128, 128>}, {pipeline_mode = #tpu.pipeline_mode<synchronous>, transform_indices = @transform_8, window_bounds = array<i64: 1, 128>}, {pipeline_mode = #tpu.pipeline_mode<synchronous>, transform_indices = @transform_9, window_bounds = array<i64: 128, 128>}, {pipeline_mode = #tpu.pipeline_mode<synchronous>, transform_indices = @transform_10, window_bounds = array<i64: 1, 128>}, {transform_indices = @transform_11, window_bounds = array<i64: 128, 128>}]} {
    %c0 = arith.constant 0 : index
    %c0_0 = arith.constant 0 : index
    %0 = vector.load %arg1[%c0, %c0_0] : memref<128x8xf32, #tpu.memory_space<vmem>>, vector<128x8xf32>
    %1 = arith.truncf %0 : vector<128x8xf32> to vector<128x8xbf16>
    %c0_1 = arith.constant 0 : index
    %c0_2 = arith.constant 0 : index
    %2 = vector.load %arg2[%c0_1, %c0_2] : memref<8x128xbf16, #tpu.memory_space<vmem>>, vector<8x128xbf16>
    %c0_3 = arith.constant 0 : index
    %c0_4 = arith.constant 0 : index
    %3 = vector.load %arg3[%c0_3, %c0_4] : memref<1x128xf32, #tpu.memory_space<vmem>>, vector<1x128xf32>
    %cst = arith.constant dense<0.000000e+00> : vector<128x128xf32>
    %4 = tpu.matmul %1, %2, %cst {dimension_numbers = #tpu.dot_dimension_numbers<[1], [0], [0], [1], [0, 0, 1, 1], [], []>} : vector<128x8xbf16>, vector<8x128xbf16>, vector<128x128xf32> -> vector<128x128xf32>
    %5 = vector.broadcast %3 : vector<1x128xf32> to vector<128x128xf32>
    %6 = arith.addf %4, %5 : vector<128x128xf32>
    %cst_5 = arith.constant 0.000000e+00 : f32
    %7 = vector.broadcast %cst_5 : f32 to vector<128x128xf32>
    %8 = arith.cmpf ogt, %6, %7 : vector<128x128xf32>
    %cst_6 = arith.constant 0.000000e+00 : f32
    %9 = vector.broadcast %cst_6 : f32 to vector<128x128xf32>
    %10 = arith.minimumf %6, %9 : vector<128x128xf32>
    %11 = math.exp %10 : vector<128x128xf32>
    %cst_7 = arith.constant 1.000000e+00 : f32
    %12 = vector.broadcast %cst_7 : f32 to vector<128x128xf32>
    %13 = arith.subf %11, %12 : vector<128x128xf32>
    %14 = arith.select %8, %6, %13 : vector<128x128xi1>, vector<128x128xf32>
    %15 = arith.truncf %14 : vector<128x128xf32> to vector<128x128xbf16>
    %c0_8 = arith.constant 0 : index
    %c0_9 = arith.constant 0 : index
    %16 = vector.load %arg4[%c0_8, %c0_9] : memref<128x128xbf16, #tpu.memory_space<vmem>>, vector<128x128xbf16>
    %c0_10 = arith.constant 0 : index
    %c0_11 = arith.constant 0 : index
    %17 = vector.load %arg5[%c0_10, %c0_11] : memref<1x128xf32, #tpu.memory_space<vmem>>, vector<1x128xf32>
    %cst_12 = arith.constant dense<0.000000e+00> : vector<128x128xf32>
    %18 = tpu.matmul %15, %16, %cst_12 {dimension_numbers = #tpu.dot_dimension_numbers<[1], [0], [0], [1], [0, 0, 1, 1], [], []>} : vector<128x128xbf16>, vector<128x128xbf16>, vector<128x128xf32> -> vector<128x128xf32>
    %19 = vector.broadcast %17 : vector<1x128xf32> to vector<128x128xf32>
    %20 = arith.addf %18, %19 : vector<128x128xf32>
    %cst_13 = arith.constant 0.000000e+00 : f32
    %21 = vector.broadcast %cst_13 : f32 to vector<128x128xf32>
    %22 = arith.cmpf ogt, %20, %21 : vector<128x128xf32>
    %cst_14 = arith.constant 0.000000e+00 : f32
    %23 = vector.broadcast %cst_14 : f32 to vector<128x128xf32>
    %24 = arith.minimumf %20, %23 : vector<128x128xf32>
    %25 = math.exp %24 : vector<128x128xf32>
    %cst_15 = arith.constant 1.000000e+00 : f32
    %26 = vector.broadcast %cst_15 : f32 to vector<128x128xf32>
    %27 = arith.subf %25, %26 : vector<128x128xf32>
    %28 = arith.select %22, %20, %27 : vector<128x128xi1>, vector<128x128xf32>
    %29 = arith.truncf %28 : vector<128x128xf32> to vector<128x128xbf16>
    %c0_16 = arith.constant 0 : index
    %c0_17 = arith.constant 0 : index
    %30 = vector.load %arg6[%c0_16, %c0_17] : memref<128x128xbf16, #tpu.memory_space<vmem>>, vector<128x128xbf16>
    %c0_18 = arith.constant 0 : index
    %c0_19 = arith.constant 0 : index
    %31 = vector.load %arg7[%c0_18, %c0_19] : memref<1x128xf32, #tpu.memory_space<vmem>>, vector<1x128xf32>
    %cst_20 = arith.constant dense<0.000000e+00> : vector<128x128xf32>
    %32 = tpu.matmul %29, %30, %cst_20 {dimension_numbers = #tpu.dot_dimension_numbers<[1], [0], [0], [1], [0, 0, 1, 1], [], []>} : vector<128x128xbf16>, vector<128x128xbf16>, vector<128x128xf32> -> vector<128x128xf32>
    %33 = vector.broadcast %31 : vector<1x128xf32> to vector<128x128xf32>
    %34 = arith.addf %32, %33 : vector<128x128xf32>
    %cst_21 = arith.constant 0.000000e+00 : f32
    %35 = vector.broadcast %cst_21 : f32 to vector<128x128xf32>
    %36 = arith.cmpf ogt, %34, %35 : vector<128x128xf32>
    %cst_22 = arith.constant 0.000000e+00 : f32
    %37 = vector.broadcast %cst_22 : f32 to vector<128x128xf32>
    %38 = arith.minimumf %34, %37 : vector<128x128xf32>
    %39 = math.exp %38 : vector<128x128xf32>
    %cst_23 = arith.constant 1.000000e+00 : f32
    %40 = vector.broadcast %cst_23 : f32 to vector<128x128xf32>
    %41 = arith.subf %39, %40 : vector<128x128xf32>
    %42 = arith.select %36, %34, %41 : vector<128x128xi1>, vector<128x128xf32>
    %43 = arith.truncf %42 : vector<128x128xf32> to vector<128x128xbf16>
    %c0_24 = arith.constant 0 : index
    %c0_25 = arith.constant 0 : index
    %44 = vector.load %arg8[%c0_24, %c0_25] : memref<128x128xbf16, #tpu.memory_space<vmem>>, vector<128x128xbf16>
    %c0_26 = arith.constant 0 : index
    %c0_27 = arith.constant 0 : index
    %45 = vector.load %arg9[%c0_26, %c0_27] : memref<1x128xf32, #tpu.memory_space<vmem>>, vector<1x128xf32>
    %cst_28 = arith.constant dense<0.000000e+00> : vector<128x128xf32>
    %46 = tpu.matmul %43, %44, %cst_28 {dimension_numbers = #tpu.dot_dimension_numbers<[1], [0], [0], [1], [0, 0, 1, 1], [], []>} : vector<128x128xbf16>, vector<128x128xbf16>, vector<128x128xf32> -> vector<128x128xf32>
    %47 = vector.broadcast %45 : vector<1x128xf32> to vector<128x128xf32>
    %48 = arith.addf %46, %47 : vector<128x128xf32>
    %cst_29 = arith.constant 0.000000e+00 : f32
    %49 = vector.broadcast %cst_29 : f32 to vector<128x128xf32>
    %50 = arith.cmpf ogt, %48, %49 : vector<128x128xf32>
    %cst_30 = arith.constant 0.000000e+00 : f32
    %51 = vector.broadcast %cst_30 : f32 to vector<128x128xf32>
    %52 = arith.minimumf %48, %51 : vector<128x128xf32>
    %53 = math.exp %52 : vector<128x128xf32>
    %cst_31 = arith.constant 1.000000e+00 : f32
    %54 = vector.broadcast %cst_31 : f32 to vector<128x128xf32>
    %55 = arith.subf %53, %54 : vector<128x128xf32>
    %56 = arith.select %50, %48, %55 : vector<128x128xi1>, vector<128x128xf32>
    %57 = arith.truncf %56 : vector<128x128xf32> to vector<128x128xbf16>
    %c0_32 = arith.constant 0 : index
    %c0_33 = arith.constant 0 : index
    %58 = vector.load %arg10[%c0_32, %c0_33] : memref<128x128xbf16, #tpu.memory_space<vmem>>, vector<128x128xbf16>
    %c0_34 = arith.constant 0 : index
    %c0_35 = arith.constant 0 : index
    %59 = vector.load %arg11[%c0_34, %c0_35] : memref<1x128xf32, #tpu.memory_space<vmem>>, vector<1x128xf32>
    %cst_36 = arith.constant dense<0.000000e+00> : vector<128x128xf32>
    %60 = tpu.matmul %57, %58, %cst_36 {dimension_numbers = #tpu.dot_dimension_numbers<[1], [0], [0], [1], [0, 0, 1, 1], [], []>} : vector<128x128xbf16>, vector<128x128xbf16>, vector<128x128xf32> -> vector<128x128xf32>
    %61 = vector.broadcast %59 : vector<1x128xf32> to vector<128x128xf32>
    %62 = arith.addf %60, %61 : vector<128x128xf32>
    %c0_37 = arith.constant 0 : index
    %c0_38 = arith.constant 0 : index
    %63 = vector.load %arg12[%c0_37, %c0_38] : memref<128x128xf32, #tpu.memory_space<vmem>>, vector<128x128xf32>
    tpu.vector_store %arg12[%c0_37, %c0_38], %62 {strides = array<i32>} : memref<128x128xf32, #tpu.memory_space<vmem>>, vector<128x128xf32>,
    return
  }
  func.func @transform_0(%arg0: i32) -> (i32, i32) {
    %c0_i32 = arith.constant 0 : i32
    %c0_i32_0 = arith.constant 0 : i32
    return %arg0, %c0_i32 : i32, i32
  }
  func.func @transform_1(%arg0: i32) -> (i32, i32) {
    %c0_i32 = arith.constant 0 : i32
    %c0_i32_0 = arith.constant 0 : i32
    %c0_i32_1 = arith.constant 0 : i32
    return %c0_i32, %c0_i32_0 : i32, i32
  }
  func.func @transform_2(%arg0: i32) -> (i32, i32) {
    %c0_i32 = arith.constant 0 : i32
    %c0_i32_0 = arith.constant 0 : i32
    %c0_i32_1 = arith.constant 0 : i32
    return %c0_i32, %c0_i32_0 : i32, i32
  }
  func.func @transform_3(%arg0: i32) -> (i32, i32) {
    %c0_i32 = arith.constant 0 : i32
    %c0_i32_0 = arith.constant 0 : i32
    %c0_i32_1 = arith.constant 0 : i32
    return %c0_i32, %c0_i32_0 : i32, i32
  }
  func.func @transform_4(%arg0: i32) -> (i32, i32) {
    %c0_i32 = arith.constant 0 : i32
    %c0_i32_0 = arith.constant 0 : i32
    %c0_i32_1 = arith.constant 0 : i32
    return %c0_i32, %c0_i32_0 : i32, i32
  }
  func.func @transform_5(%arg0: i32) -> (i32, i32) {
    %c0_i32 = arith.constant 0 : i32
    %c0_i32_0 = arith.constant 0 : i32
    %c0_i32_1 = arith.constant 0 : i32
    return %c0_i32, %c0_i32_0 : i32, i32
  }
  func.func @transform_6(%arg0: i32) -> (i32, i32) {
    %c0_i32 = arith.constant 0 : i32
    %c0_i32_0 = arith.constant 0 : i32
    %c0_i32_1 = arith.constant 0 : i32
    return %c0_i32, %c0_i32_0 : i32, i32
  }
  func.func @transform_7(%arg0: i32) -> (i32, i32) {
    %c0_i32 = arith.constant 0 : i32
    %c0_i32_0 = arith.constant 0 : i32
    %c0_i32_1 = arith.constant 0 : i32
    return %c0_i32, %c0_i32_0 : i32, i32
  }
  func.func @transform_8(%arg0: i32) -> (i32, i32) {
    %c0_i32 = arith.constant 0 : i32
    %c0_i32_0 = arith.constant 0 : i32
    %c0_i32_1 = arith.constant 0 : i32
    return %c0_i32, %c0_i32_0 : i32, i32
  }
  func.func @transform_9(%arg0: i32) -> (i32, i32) {
    %c0_i32 = arith.constant 0 : i32
    %c0_i32_0 = arith.constant 0 : i32
    %c0_i32_1 = arith.constant 0 : i32
    return %c0_i32, %c0_i32_0 : i32, i32
  }
  func.func @transform_10(%arg0: i32) -> (i32, i32) {
    %c0_i32 = arith.constant 0 : i32
    %c0_i32_0 = arith.constant 0 : i32
    %c0_i32_1 = arith.constant 0 : i32
    return %c0_i32, %c0_i32_0 : i32, i32
  }
  func.func @transform_11(%arg0: i32) -> (i32, i32) {
    %c0_i32 = arith.constant 0 : i32
    %c0_i32_0 = arith.constant 0 : i32
    return %arg0, %c0_i32 : i32, i32
  }
}

module attributes {stable_mosaic.version = 11 : i64} {
  func.func @_mlp_kernel(%arg0: i32, %arg1: memref<128x8xf32, #tpu.memory_space<vmem>>, %arg2: memref<8x128xbf16, #tpu.memory_space<vmem>>, %arg3: memref<1x128xf32, #tpu.memory_space<vmem>>, %arg4: memref<128x128xbf16, #tpu.memory_space<vmem>>, %arg5: memref<1x128xf32, #tpu.memory_space<vmem>>, %arg6: memref<128x128xbf16, #tpu.memory_space<vmem>>, %arg7: memref<1x128xf32, #tpu.memory_space<vmem>>, %arg8: memref<128x128xbf16, #tpu.memory_space<vmem>>, %arg9: memref<1x128xf32, #tpu.memory_space<vmem>>, %arg10: memref<128x128xbf16, #tpu.memory_space<vmem>>, %arg11: memref<1x128xf32, #tpu.memory_space<vmem>>, %arg12: memref<128x128xf32, #tpu.memory_space<vmem>>) attributes {dimension_semantics = [#tpu.dimension_semantics<parallel>], iteration_bounds = array<i64: 1>, scalar_prefetch = 0 : i64, scratch_operands = 0 : i64, tpu.core_type = #tpu.core_type<tc>, window_params = [{transform_indices = @transform_0, window_bounds = array<i64: 128, 8>}, {pipeline_mode = #tpu.pipeline_mode<synchronous>, transform_indices = @transform_1, window_bounds = array<i64: 8, 128>}, {pipeline_mode = #tpu.pipeline_mode<synchronous>, transform_indices = @transform_2, window_bounds = array<i64: 1, 128>}, {pipeline_mode = #tpu.pipeline_mode<synchronous>, transform_indices = @transform_3, window_bounds = array<i64: 128, 128>}, {pipeline_mode = #tpu.pipeline_mode<synchronous>, transform_indices = @transform_4, window_bounds = array<i64: 1, 128>}, {pipeline_mode = #tpu.pipeline_mode<synchronous>, transform_indices = @transform_5, window_bounds = array<i64: 128, 128>}, {pipeline_mode = #tpu.pipeline_mode<synchronous>, transform_indices = @transform_6, window_bounds = array<i64: 1, 128>}, {pipeline_mode = #tpu.pipeline_mode<synchronous>, transform_indices = @transform_7, window_bounds = array<i64: 128, 128>}, {pipeline_mode = #tpu.pipeline_mode<synchronous>, transform_indices = @transform_8, window_bounds = array<i64: 1, 128>}, {pipeline_mode = #tpu.pipeline_mode<synchronous>, transform_indices = @transform_9, window_bounds = array<i64: 128, 128>}, {pipeline_mode = #tpu.pipeline_mode<synchronous>, transform_indices = @transform_10, window_bounds = array<i64: 1, 128>}, {transform_indices = @transform_11, window_bounds = array<i64: 128, 128>}]} {
    %c0 = arith.constant 0 : index
    %c0_0 = arith.constant 0 : index
    %0 = vector.load %arg1[%c0, %c0_0] : memref<128x8xf32, #tpu.memory_space<vmem>>, vector<128x8xf32>
    %1 = arith.truncf %0 : vector<128x8xf32> to vector<128x8xbf16>
    %c0_1 = arith.constant 0 : index
    %c0_2 = arith.constant 0 : index
    %2 = vector.load %arg2[%c0_1, %c0_2] : memref<8x128xbf16, #tpu.memory_space<vmem>>, vector<8x128xbf16>
    %c0_3 = arith.constant 0 : index
    %c0_4 = arith.constant 0 : index
    %3 = vector.load %arg3[%c0_3, %c0_4] : memref<1x128xf32, #tpu.memory_space<vmem>>, vector<1x128xf32>
    %cst = arith.constant dense<0.000000e+00> : vector<128x128xf32>
    %4 = tpu.matmul %1, %2, %cst {dimension_numbers = #tpu.dot_dimension_numbers<[1], [0], [0], [1], [0, 0, 1, 1], [], []>} : vector<128x8xbf16>, vector<8x128xbf16>, vector<128x128xf32> -> vector<128x128xf32>
    %5 = vector.broadcast %3 : vector<1x128xf32> to vector<128x128xf32>
    %6 = arith.addf %4, %5 : vector<128x128xf32>
    %cst_5 = arith.constant 0.000000e+00 : f32
    %7 = vector.broadcast %cst_5 : f32 to vector<128x128xf32>
    %8 = arith.cmpf ogt, %6, %7 : vector<128x128xf32>
    %cst_6 = arith.constant 0.000000e+00 : f32
    %9 = vector.broadcast %cst_6 : f32 to vector<128x128xf32>
    %10 = arith.minimumf %6, %9 : vector<128x128xf32>
    %11 = math.exp %10 : vector<128x128xf32>
    %cst_7 = arith.constant 1.000000e+00 : f32
    %12 = vector.broadcast %cst_7 : f32 to vector<128x128xf32>
    %13 = arith.subf %11, %12 : vector<128x128xf32>
    %14 = arith.select %8, %6, %13 : vector<128x128xi1>, vector<128x128xf32>
    %15 = arith.truncf %14 : vector<128x128xf32> to vector<128x128xbf16>
    %c0_8 = arith.constant 0 : index
    %c0_9 = arith.constant 0 : index
    %16 = vector.load %arg4[%c0_8, %c0_9] : memref<128x128xbf16, #tpu.memory_space<vmem>>, vector<128x128xbf16>
    %c0_10 = arith.constant 0 : index
    %c0_11 = arith.constant 0 : index
    %17 = vector.load %arg5[%c0_10, %c0_11] : memref<1x128xf32, #tpu.memory_space<vmem>>, vector<1x128xf32>
    %cst_12 = arith.constant dense<0.000000e+00> : vector<128x128xf32>
    %18 = tpu.matmul %15, %16, %cst_12 {dimension_numbers = #tpu.dot_dimension_numbers<[1], [0], [0], [1], [0, 0, 1, 1], [], []>} : vector<128x128xbf16>, vector<128x128xbf16>, vector<128x128xf32> -> vector<128x128xf32>
    %19 = vector.broadcast %17 : vector<1x128xf32> to vector<128x128xf32>
    %20 = arith.addf %18, %19 : vector<128x128xf32>
    %cst_13 = arith.constant 0.000000e+00 : f32
    %21 = vector.broadcast %cst_13 : f32 to vector<128x128xf32>
    %22 = arith.cmpf ogt, %20, %21 : vector<128x128xf32>
    %cst_14 = arith.constant 0.000000e+00 : f32
    %23 = vector.broadcast %cst_14 : f32 to vector<128x128xf32>
    %24 = arith.minimumf %20, %23 : vector<128x128xf32>
    %25 = math.exp %24 : vector<128x128xf32>
    %cst_15 = arith.constant 1.000000e+00 : f32
    %26 = vector.broadcast %cst_15 : f32 to vector<128x128xf32>
    %27 = arith.subf %25, %26 : vector<128x128xf32>
    %28 = arith.select %22, %20, %27 : vector<128x128xi1>, vector<128x128xf32>
    %29 = arith.truncf %28 : vector<128x128xf32> to vector<128x128xbf16>
    %c0_16 = arith.constant 0 : index
    %c0_17 = arith.constant 0 : index
    %30 = vector.load %arg6[%c0_16, %c0_17] : memref<128x128xbf16, #tpu.memory_space<vmem>>, vector<128x128xbf16>
    %c0_18 = arith.constant 0 : index
    %c0_19 = arith.constant 0 : index
    %31 = vector.load %arg7[%c0_18, %c0_19] : memref<1x128xf32, #tpu.memory_space<vmem>>, vector<1x128xf32>
    %cst_20 = arith.constant dense<0.000000e+00> : vector<128x128xf32>
    %32 = tpu.matmul %29, %30, %cst_20 {dimension_numbers = #tpu.dot_dimension_numbers<[1], [0], [0], [1], [0, 0, 1, 1], [], []>} : vector<128x128xbf16>, vector<128x128xbf16>, vector<128x128xf32> -> vector<128x128xf32>
    %33 = vector.broadcast %31 : vector<1x128xf32> to vector<128x128xf32>
    %34 = arith.addf %32, %33 : vector<128x128xf32>
    %cst_21 = arith.constant 0.000000e+00 : f32
    %35 = vector.broadcast %cst_21 : f32 to vector<128x128xf32>
    %36 = arith.cmpf ogt, %34, %35 : vector<128x128xf32>
    %cst_22 = arith.constant 0.000000e+00 : f32
    %37 = vector.broadcast %cst_22 : f32 to vector<128x128xf32>
    %38 = arith.minimumf %34, %37 : vector<128x128xf32>
    %39 = math.exp %38 : vector<128x128xf32>
    %cst_23 = arith.constant 1.000000e+00 : f32
    %40 = vector.broadcast %cst_23 : f32 to vector<128x128xf32>
    %41 = arith.subf %39, %40 : vector<128x128xf32>
    %42 = arith.select %36, %34, %41 : vector<128x128xi1>, vector<128x128xf32>
    %43 = arith.truncf %42 : vector<128x128xf32> to vector<128x128xbf16>
    %c0_24 = arith.constant 0 : index
    %c0_25 = arith.constant 0 : index
    %44 = vector.load %arg8[%c0_24, %c0_25] : memref<128x128xbf16, #tpu.memory_space<vmem>>, vector<128x128xbf16>
    %c0_26 = arith.constant 0 : index
    %c0_27 = arith.constant 0 : index
    %45 = vector.load %arg9[%c0_26, %c0_27] : memref<1x128xf32, #tpu.memory_space<vmem>>, vector<1x128xf32>
    %cst_28 = arith.constant dense<0.000000e+00> : vector<128x128xf32>
    %46 = tpu.matmul %43, %44, %cst_28 {dimension_numbers = #tpu.dot_dimension_numbers<[1], [0], [0], [1], [0, 0, 1, 1], [], []>} : vector<128x128xbf16>, vector<128x128xbf16>, vector<128x128xf32> -> vector<128x128xf32>
    %47 = vector.broadcast %45 : vector<1x128xf32> to vector<128x128xf32>
    %48 = arith.addf %46, %47 : vector<128x128xf32>
    %cst_29 = arith.constant 0.000000e+00 : f32
    %49 = vector.broadcast %cst_29 : f32 to vector<128x128xf32>
    %50 = arith.cmpf ogt, %48, %49 : vector<128x128xf32>
    %cst_30 = arith.constant 0.000000e+00 : f32
    %51 = vector.broadcast %cst_30 : f32 to vector<128x128xf32>
    %52 = arith.minimumf %48, %51 : vector<128x128xf32>
    %53 = math.exp %52 : vector<128x128xf32>
    %cst_31 = arith.constant 1.000000e+00 : f32
    %54 = vector.broadcast %cst_31 : f32 to vector<128x128xf32>
    %55 = arith.subf %53, %54 : vector<128x128xf32>
    %56 = arith.select %50, %48, %55 : vector<128x128xi1>, vector<128x128xf32>
    %57 = arith.truncf %56 : vector<128x128xf32> to vector<128x128xbf16>
    %c0_32 = arith.constant 0 : index
    %c0_33 = arith.constant 0 : index
    %58 = vector.load %arg10[%c0_32, %c0_33] : memref<128x128xbf16, #tpu.memory_space<vmem>>, vector<128x128xbf16>
    %c0_34 = arith.constant 0 : index
    %c0_35 = arith.constant 0 : index
    %59 = vector.load %arg11[%c0_34, %c0_35] : memref<1x128xf32, #tpu.memory_space<vmem>>, vector<1x128xf32>
    %cst_36 = arith.constant dense<0.000000e+00> : vector<128x128xf32>
    %60 = tpu.matmul %57, %58, %cst_36 {dimension_numbers = #tpu.dot_dimension_numbers<[1], [0], [0], [1], [0, 0, 1, 1], [], []>} : vector<128x128xbf16>, vector<128x128xbf16>, vector<128x128xf32> -> vector<128x128xf32>
    %61 = vector.broadcast %59 : vector<1x128xf32> to vector<128x128xf32>
    %62 = arith.addf %60, %61 : vector<128x128xf32>
    %c0_37 = arith.constant 0 : index
    %c0_38 = arith.constant 0 : index
    %63 = vector.load %arg12[%c0_37, %c0_38] : memref<128x128xf32, #tpu.memory_space<vmem>>, vector<128x128xf32>
    tpu.vector_store %arg12[%c0_37, %c0_38], %62 {strides = array<i32>} : memref<128x128xf32, #tpu.memory_space<vmem>>, vector<128x128xf32>,
    return
  }
  func.func @transform_0(%arg0: i32) -> (i32, i32) {
    %c0_i32 = arith.constant 0 : i32
    %c0_i32_0 = arith.constant 0 : i32
    return %arg0, %c0_i32 : i32, i32
  }
  func.func @transform_1(%arg0: i32) -> (i32, i32) {
    %c0_i32 = arith.constant 0 : i32
    %c0_i32_0 = arith.constant 0 : i32
    %c0_i32_1 = arith.constant 0 : i32
    return %c0_i32, %c0_i32_0 : i32, i32
  }
  func.func @transform_2(%arg0: i32) -> (i32, i32) {
    %c0_i32 = arith.constant 0 : i32
    %c0_i32_0 = arith.constant 0 : i32
    %c0_i32_1 = arith.constant 0 : i32
    return %c0_i32, %c0_i32_0 : i32, i32
  }
  func.func @transform_3(%arg0: i32) -> (i32, i32) {
    %c0_i32 = arith.constant 0 : i32
    %c0_i32_0 = arith.constant 0 : i32
    %c0_i32_1 = arith.constant 0 : i32
    return %c0_i32, %c0_i32_0 : i32, i32
  }
  func.func @transform_4(%arg0: i32) -> (i32, i32) {
    %c0_i32 = arith.constant 0 : i32
    %c0_i32_0 = arith.constant 0 : i32
    %c0_i32_1 = arith.constant 0 : i32
    return %c0_i32, %c0_i32_0 : i32, i32
  }
  func.func @transform_5(%arg0: i32) -> (i32, i32) {
    %c0_i32 = arith.constant 0 : i32
    %c0_i32_0 = arith.constant 0 : i32
    %c0_i32_1 = arith.constant 0 : i32
    return %c0_i32, %c0_i32_0 : i32, i32
  }
  func.func @transform_6(%arg0: i32) -> (i32, i32) {
    %c0_i32 = arith.constant 0 : i32
    %c0_i32_0 = arith.constant 0 : i32
    %c0_i32_1 = arith.constant 0 : i32
    return %c0_i32, %c0_i32_0 : i32, i32
  }
  func.func @transform_7(%arg0: i32) -> (i32, i32) {
    %c0_i32 = arith.constant 0 : i32
    %c0_i32_0 = arith.constant 0 : i32
    %c0_i32_1 = arith.constant 0 : i32
    return %c0_i32, %c0_i32_0 : i32, i32
  }
  func.func @transform_8(%arg0: i32) -> (i32, i32) {
    %c0_i32 = arith.constant 0 : i32
    %c0_i32_0 = arith.constant 0 : i32
    %c0_i32_1 = arith.constant 0 : i32
    return %c0_i32, %c0_i32_0 : i32, i32
  }
  func.func @transform_9(%arg0: i32) -> (i32, i32) {
    %c0_i32 = arith.constant 0 : i32
    %c0_i32_0 = arith.constant 0 : i32
    %c0_i32_1 = arith.constant 0 : i32
    return %c0_i32, %c0_i32_0 : i32, i32
  }
  func.func @transform_10(%arg0: i32) -> (i32, i32) {
    %c0_i32 = arith.constant 0 : i32
    %c0_i32_0 = arith.constant 0 : i32
    %c0_i32_1 = arith.constant 0 : i32
    return %c0_i32, %c0_i32_0 : i32, i32
  }
  func.func @transform_11(%arg0: i32) -> (i32, i32) {
    %c0_i32 = arith.constant 0 : i32
    %c0_i32_0 = arith.constant 0 : i32
    return %arg0, %c0_i32 : i32, i32
  }
}

</mosaic_0001>

<llo_original>
// kernel: decoder_forward.1
$region0: #{decoder_forward.1}
  #allocation0 [shape = 'u32[]', space=smem, size = 0x4, offset = 0x4, fixed_abs, tag = 'smem constant byte address 0x4 - core index']
  #allocation1 [shape = 'u32[144,128]{1,0:T(1,128)}', space=vmem, size = 0x12000, scoped, tag = 'internal scratch']
  %s0 = inlined_call_operand.vmem [shape: f32[128,8], index: 0, kind: input, shape index: {}]
  %s1 = inlined_call_operand.vmem [shape: bf16[8,128], index: 1, kind: input, shape index: {}]
  %s2 = inlined_call_operand.vmem [shape: f32[1,128], index: 2, kind: input, shape index: {}]
  %s3 = inlined_call_operand.vmem [shape: bf16[128,128], index: 3, kind: input, shape index: {}]
  %s4 = inlined_call_operand.vmem [shape: f32[1,128], index: 4, kind: input, shape index: {}]
  %s5 = inlined_call_operand.vmem [shape: bf16[128,128], index: 5, kind: input, shape index: {}]
  %s6 = inlined_call_operand.vmem [shape: f32[1,128], index: 6, kind: input, shape index: {}]
  %s7 = inlined_call_operand.vmem [shape: bf16[128,128], index: 7, kind: input, shape index: {}]
  %s8 = inlined_call_operand.vmem [shape: f32[1,128], index: 8, kind: input, shape index: {}]
  %s9 = inlined_call_operand.vmem [shape: bf16[128,128], index: 9, kind: input, shape index: {}]
  %s10 = inlined_call_operand.vmem [shape: f32[1,128], index: 10, kind: input, shape index: {}]
  %s11 = inlined_call_operand.vmem [shape: f32[128,128], index: 11, kind: output, shape index: {}]
  %s12 = sld [smem:[#allocation0]]
  $region54: #{decoder_forward.1} parent=0
    _
  %s14 = ssub.s32 1, %s12
  %s15 = scalar_select 0, %s14, %s12
  // Predicated region
  $region2: #{decoder_forward.1} parent=0 // pred_check
    _
  $region3: #{decoder_forward.1} parent=0 // pred_check_branch
    %17 = sbr.rel (0) target = $region5
  $region4: #{decoder_forward.1} parent=0 // pred_region
    _
  $region5: #{decoder_forward.1} parent=0 // pred_fallthru
    _
  // Predicated region
  $region6: #{decoder_forward.1} parent=0 // pred_check
    _
  $region7: #{decoder_forward.1} parent=0 // pred_check_branch
    %19 = sbr.rel (0) target = $region9
  $region8: #{decoder_forward.1} parent=0 // pred_region
    _
  $region9: #{decoder_forward.1} parent=0 // pred_fallthru
    _
  // Predicated region
  $region10: #{decoder_forward.1} parent=0 // pred_check
    _
  $region11: #{decoder_forward.1} parent=0 // pred_check_branch
    %21 = sbr.rel (0) target = $region13
  $region12: #{decoder_forward.1} parent=0 // pred_region
    _
  $region13: #{decoder_forward.1} parent=0 // pred_fallthru
    _
  // Predicated region
  $region14: #{decoder_forward.1} parent=0 // pred_check
    _
  $region15: #{decoder_forward.1} parent=0 // pred_check_branch
    %23 = sbr.rel (0) target = $region17
  $region16: #{decoder_forward.1} parent=0 // pred_region
    _
  $region17: #{decoder_forward.1} parent=0 // pred_fallthru
    _
  // Predicated region
  $region18: #{decoder_forward.1} parent=0 // pred_check
    _
  $region19: #{decoder_forward.1} parent=0 // pred_check_branch
    %25 = sbr.rel (0) target = $region21
  $region20: #{decoder_forward.1} parent=0 // pred_region
    _
  $region21: #{decoder_forward.1} parent=0 // pred_fallthru
    _
  // Predicated region
  $region22: #{decoder_forward.1} parent=0 // pred_check
    _
  $region23: #{decoder_forward.1} parent=0 // pred_check_branch
    %27 = sbr.rel (0) target = $region25
  $region24: #{decoder_forward.1} parent=0 // pred_region
    _
  $region25: #{decoder_forward.1} parent=0 // pred_fallthru
    _
  // Predicated region
  $region26: #{decoder_forward.1} parent=0 // pred_check
    _
  $region27: #{decoder_forward.1} parent=0 // pred_check_branch
    %29 = sbr.rel (0) target = $region29
  $region28: #{decoder_forward.1} parent=0 // pred_region
    _
  $region29: #{decoder_forward.1} parent=0 // pred_fallthru
    _
  // Predicated region
  $region30: #{decoder_forward.1} parent=0 // pred_check
    _
  $region31: #{decoder_forward.1} parent=0 // pred_check_branch
    %31 = sbr.rel (0) target = $region33
  $region32: #{decoder_forward.1} parent=0 // pred_region
    _
  $region33: #{decoder_forward.1} parent=0 // pred_fallthru
    _
  // Predicated region
  $region34: #{decoder_forward.1} parent=0 // pred_check
    _
  $region35: #{decoder_forward.1} parent=0 // pred_check_branch
    %33 = sbr.rel (0) target = $region37
  $region36: #{decoder_forward.1} parent=0 // pred_region
    _
  $region37: #{decoder_forward.1} parent=0 // pred_fallthru
    _
  // Predicated region
  $region38: #{decoder_forward.1} parent=0 // pred_check
    _
  $region39: #{decoder_forward.1} parent=0 // pred_check_branch
    %35 = sbr.rel (0) target = $region41
  $region40: #{decoder_forward.1} parent=0 // pred_region
    _
  $region41: #{decoder_forward.1} parent=0 // pred_fallthru
    _
  // Predicated region
  $region42: #{decoder_forward.1} parent=0 // pred_check
    _
  $region43: #{decoder_forward.1} parent=0 // pred_check_branch
    %37 = sbr.rel (0) target = $region45
  $region44: #{decoder_forward.1} parent=0 // pred_region
    _
  $region45: #{decoder_forward.1} parent=0 // pred_fallthru
    _
  %v39 = vld [vmem:[%s0] sm:$0xff]
  %v40 = vld [vmem:[%s0 + $0x8] sm:$0xff]
  %v41 = vld [vmem:[%s0 + $0x10] sm:$0xff]
  %v42 = vld [vmem:[%s0 + $0x18] sm:$0xff]
  %v43 = vld [vmem:[%s0 + $0x20] sm:$0xff]
  %v44 = vld [vmem:[%s0 + $0x28] sm:$0xff]
  %v45 = vld [vmem:[%s0 + $0x30] sm:$0xff]
  %v46 = vld [vmem:[%s0 + $0x38] sm:$0xff]
  %v47 = vld [vmem:[%s0 + $0x40] sm:$0xff]
  %v48 = vld [vmem:[%s0 + $0x48] sm:$0xff]
  %v49 = vld [vmem:[%s0 + $0x50] sm:$0xff]
  %v50 = vld [vmem:[%s0 + $0x58] sm:$0xff]
  %v51 = vld [vmem:[%s0 + $0x60] sm:$0xff]
  %v52 = vld [vmem:[%s0 + $0x68] sm:$0xff]
  %v53 = vld [vmem:[%s0 + $0x70] sm:$0xff]
  %v54 = vld [vmem:[%s0 + $0x78] sm:$0xff]
  %v55 = vpack.c.bf16 %v40, %v39
  %v56 = vpack.c.bf16 %v42, %v41
  %v57 = vpack.c.bf16 %v44, %v43
  %v58 = vpack.c.bf16 %v46, %v45
  %v59 = vpack.c.bf16 %v48, %v47
  %v60 = vpack.c.bf16 %v50, %v49
  %v61 = vpack.c.bf16 %v52, %v51
  %v62 = vpack.c.bf16 %v54, %v53
  %v63 = vld [vmem:[%s1] sm:$0xf]
  %v64 = vld [vmem:[%s2] sm:$0x1]
  %v66 = vlaneseq
  %v67 = vshrl.u32 %v66, 7
  %v68 = vsub.s32 0, %v67
  %v69 = vrot.slane %v64, %v68
  %vm71 = vcmask 64512
  %v73 = vsel %vm71, %v55, 0
  %v76 = vsel %vm71, %v56, 0
  %v79 = vsel %vm71, %v57, 0
  %v82 = vsel %vm71, %v58, 0
  %v85 = vsel %vm71, %v59, 0
  %v88 = vsel %vm71, %v60, 0
  %v91 = vsel %vm71, %v61, 0
  %v94 = vsel %vm71, %v62, 0
  %vm96 = vcmask 1043456
  %v98 = vsel %vm96, %v63, 0
  %100 = vmatprep.subr.bf16.mxu0 0
  %101 = vmatpush1.bf16.msra.mxu0 %v98
  %102 = vmatprep.subr.bf16.mxu0 0
  %103 = vmatpush1.bf16.msra.mxu0 0
  %104 = vmatprep.subr.bf16.mxu0 0
  %105 = vmatpush1.bf16.msra.mxu0 0
  %106 = vmatprep.subr.bf16.mxu0 0
  %107 = vmatpush1.bf16.msra.mxu0 0
  %108 = vmatprep.subr.bf16.mxu0 0
  %109 = vmatpush1.bf16.msra.mxu0 0
  %110 = vmatprep.subr.bf16.mxu0 0
  %111 = vmatpush1.bf16.msra.mxu0 0
  %112 = vmatprep.subr.bf16.mxu0 0
  %113 = vmatpush1.bf16.msra.mxu0 0
  %114 = vmatprep.subr.bf16.mxu0 0
  %115 = vmatpush1.bf16.msra.mxu0 0
  %116 = vmatprep.subr.bf16.mxu0 0
  %117 = vmatpush1.bf16.msra.mxu0 0
  %118 = vmatprep.subr.bf16.mxu0 0
  %119 = vmatpush1.bf16.msra.mxu0 0
  %120 = vmatprep.subr.bf16.mxu0 0
  %121 = vmatpush1.bf16.msra.mxu0 0
  %122 = vmatprep.subr.bf16.mxu0 0
  %123 = vmatpush1.bf16.msra.mxu0 0
  %124 = vmatprep.subr.bf16.mxu0 0
  %125 = vmatpush1.bf16.msra.mxu0 0
  %126 = vmatprep.subr.bf16.mxu0 0
  %127 = vmatpush1.bf16.msra.mxu0 0
  %128 = vmatprep.subr.bf16.mxu0 0
  %129 = vmatpush1.bf16.msra.mxu0 0
  %130 = vmatprep.subr.bf16.mxu0 0
  %131 = vmatpush1.bf16.msra.mxu0 0
  %132 = vmatprep.mubr.bf16.mxu0 0
  %133 = vmatmul.mubr.bf16.gmra.mrb[0].mxu0 %v73
  %v134 = vpop.f32.mrb[0].mxu0
  %v135 = vadd.f32 %v69, %v134
  %v136 = vpop.f32.mrb[0].mxu0
  %v137 = vpop.f32.mrb[0].mxu0
  %v138 = vadd.f32 %v69, %v137
  %v139 = vpop.f32.mrb[0].mxu0
  %140 = vmatprep.mubr.bf16.mxu0 0
  %141 = vmatmul.mubr.bf16.gmra.mrb[0].mxu0 %v76
  %v142 = vpop.f32.mrb[0].mxu0
  %v143 = vadd.f32 %v69, %v142
  %v144 = vpop.f32.mrb[0].mxu0
  %v145 = vpop.f32.mrb[0].mxu0
  %v146 = vadd.f32 %v69, %v145
  %v147 = vpop.f32.mrb[0].mxu0
  %148 = vmatprep.mubr.bf16.mxu0 0
  %149 = vmatmul.mubr.bf16.gmra.mrb[0].mxu0 %v79
  %v150 = vpop.f32.mrb[0].mxu0
  %v151 = vadd.f32 %v69, %v150
  %v152 = vpop.f32.mrb[0].mxu0
  %v153 = vpop.f32.mrb[0].mxu0
  %v154 = vadd.f32 %v69, %v153
  %v155 = vpop.f32.mrb[0].mxu0
  %156 = vmatprep.mubr.bf16.mxu0 0
  %157 = vmatmul.mubr.bf16.gmra.mrb[0].mxu0 %v82
  %v158 = vpop.f32.mrb[0].mxu0
  %v159 = vadd.f32 %v69, %v158
  %v160 = vpop.f32.mrb[0].mxu0
  %v161 = vpop.f32.mrb[0].mxu0
  %v162 = vadd.f32 %v69, %v161
  %v163 = vpop.f32.mrb[0].mxu0
  %164 = vmatprep.mubr.bf16.mxu0 0
  %165 = vmatmul.mubr.bf16.gmra.mrb[0].mxu0 %v85
  %v166 = vpop.f32.mrb[0].mxu0
  %v167 = vadd.f32 %v69, %v166
  %v168 = vpop.f32.mrb[0].mxu0
  %v169 = vpop.f32.mrb[0].mxu0
  %v170 = vadd.f32 %v69, %v169
  %v171 = vpop.f32.mrb[0].mxu0
  %172 = vmatprep.mubr.bf16.mxu0 0
  %173 = vmatmul.mubr.bf16.gmra.mrb[0].mxu0 %v88
  %v174 = vpop.f32.mrb[0].mxu0
  %v175 = vadd.f32 %v69, %v174
  %v176 = vpop.f32.mrb[0].mxu0
  %v177 = vpop.f32.mrb[0].mxu0
  %v178 = vadd.f32 %v69, %v177
  %v179 = vpop.f32.mrb[0].mxu0
  %180 = vmatprep.mubr.bf16.mxu0 0
  %181 = vmatmul.mubr.bf16.gmra.mrb[0].mxu0 %v91
  %v182 = vpop.f32.mrb[0].mxu0
  %v183 = vadd.f32 %v69, %v182
  %v184 = vpop.f32.mrb[0].mxu0
  %v185 = vpop.f32.mrb[0].mxu0
  %v186 = vadd.f32 %v69, %v185
  %v187 = vpop.f32.mrb[0].mxu0
  %188 = vmatprep.mubr.bf16.mxu0 0
  %189 = vmatmul.mubr.bf16.gmra.mrb[0].mxu0 %v94
  %v190 = vpop.f32.mrb[0].mxu0
  %v191 = vadd.f32 %v69, %v190
  %v192 = vpop.f32.mrb[0].mxu0
  %v193 = vpop.f32.mrb[0].mxu0
  %v194 = vadd.f32 %v69, %v193
  %v195 = vpop.f32.mrb[0].mxu0
  %196 = vdwg.mxu0
  %vm197 = vcmp.gt.f32.partialorder %v135, 0.0
  %vm198 = vcmp.gt.f32.partialorder %v138, 0.0
  %vm199 = vcmp.gt.f32.partialorder %v143, 0.0
  %vm200 = vcmp.gt.f32.partialorder %v146, 0.0
  %vm201 = vcmp.gt.f32.partialorder %v151, 0.0
  %vm202 = vcmp.gt.f32.partialorder %v154, 0.0
  %vm203 = vcmp.gt.f32.partialorder %v159, 0.0
  %vm204 = vcmp.gt.f32.partialorder %v162, 0.0
  %vm205 = vcmp.gt.f32.partialorder %v167, 0.0
  %vm206 = vcmp.gt.f32.partialorder %v170, 0.0
  %vm207 = vcmp.gt.f32.partialorder %v175, 0.0
  %vm208 = vcmp.gt.f32.partialorder %v178, 0.0
  %vm209 = vcmp.gt.f32.partialorder %v183, 0.0
  %vm210 = vcmp.gt.f32.partialorder %v186, 0.0
  %vm211 = vcmp.gt.f32.partialorder %v191, 0.0
  %vm212 = vcmp.gt.f32.partialorder %v194, 0.0
  %v213 = vmin.f32 %v135, 0.0
  %v214 = vmin.f32 %v138, 0.0
  %v215 = vmin.f32 %v143, 0.0
  %v216 = vmin.f32 %v146, 0.0
  %v217 = vmin.f32 %v151, 0.0
  %v218 = vmin.f32 %v154, 0.0
  %v219 = vmin.f32 %v159, 0.0
  %v220 = vmin.f32 %v162, 0.0
  %v221 = vmin.f32 %v167, 0.0
  %v222 = vmin.f32 %v170, 0.0
  %v223 = vmin.f32 %v175, 0.0
  %v224 = vmin.f32 %v178, 0.0
  %v225 = vmin.f32 %v183, 0.0
  %v226 = vmin.f32 %v186, 0.0
  %v227 = vmin.f32 %v191, 0.0
  %v228 = vmin.f32 %v194, 0.0
  %v229 = vmul.f32 %v213, 1.442695
  %v230 = vpow.pop %v229
  %v231 = vmul.f32 %v214, 1.442695
  %v232 = vpow.pop %v231
  %v233 = vmul.f32 %v215, 1.442695
  %v234 = vpow.pop %v233
  %v235 = vmul.f32 %v216, 1.442695
  %v236 = vpow.pop %v235
  %v237 = vmul.f32 %v217, 1.442695
  %v238 = vpow.pop %v237
  %v239 = vmul.f32 %v218, 1.442695
  %v240 = vpow.pop %v239
  %v241 = vmul.f32 %v219, 1.442695
  %v242 = vpow.pop %v241
  %v243 = vmul.f32 %v220, 1.442695
  %v244 = vpow.pop %v243
  %v245 = vmul.f32 %v221, 1.442695
  %v246 = vpow.pop %v245
  %v247 = vmul.f32 %v222, 1.442695
  %v248 = vpow.pop %v247
  %v249 = vmul.f32 %v223, 1.442695
  %v250 = vpow.pop %v249
  %v251 = vmul.f32 %v224, 1.442695
  %v252 = vpow.pop %v251
  %v253 = vmul.f32 %v225, 1.442695
  %v254 = vpow.pop %v253
  %v255 = vmul.f32 %v226, 1.442695
  %v256 = vpow.pop %v255
  %v257 = vmul.f32 %v227, 1.442695
  %v258 = vpow.pop %v257
  %v259 = vmul.f32 %v228, 1.442695
  %v260 = vpow.pop %v259
  %v261 = vsub.f32 %v230, 1.0
  %v262 = vsub.f32 %v232, 1.0
  %v263 = vsub.f32 %v234, 1.0
  %v264 = vsub.f32 %v236, 1.0
  %v265 = vsub.f32 %v238, 1.0
  %v266 = vsub.f32 %v240, 1.0
  %v267 = vsub.f32 %v242, 1.0
  %v268 = vsub.f32 %v244, 1.0
  %v269 = vsub.f32 %v246, 1.0
  %v270 = vsub.f32 %v248, 1.0
  %v271 = vsub.f32 %v250, 1.0
  %v272 = vsub.f32 %v252, 1.0
  %v273 = vsub.f32 %v254, 1.0
  %v274 = vsub.f32 %v256, 1.0
  %v275 = vsub.f32 %v258, 1.0
  %v276 = vsub.f32 %v260, 1.0
  %v277 = vsel %vm197, %v135, %v261
  %v278 = vsel %vm198, %v138, %v262
  %v279 = vsel %vm199, %v143, %v263
  %v280 = vsel %vm200, %v146, %v264
  %v281 = vsel %vm201, %v151, %v265
  %v282 = vsel %vm202, %v154, %v266
  %v283 = vsel %vm203, %v159, %v267
  %v284 = vsel %vm204, %v162, %v268
  %v285 = vsel %vm205, %v167, %v269
  %v286 = vsel %vm206, %v170, %v270
  %v287 = vsel %vm207, %v175, %v271
  %v288 = vsel %vm208, %v178, %v272
  %v289 = vsel %vm209, %v183, %v273
  %v290 = vsel %vm210, %v186, %v274
  %v291 = vsel %vm211, %v191, %v275
  %v292 = vsel %vm212, %v194, %v276
  %v293 = vpack.c.bf16 %v278, %v277
  %v294 = vpack.c.bf16 %v280, %v279
  %v295 = vpack.c.bf16 %v282, %v281
  %v296 = vpack.c.bf16 %v284, %v283
  %v297 = vpack.c.bf16 %v286, %v285
  %v298 = vpack.c.bf16 %v288, %v287
  %v299 = vpack.c.bf16 %v290, %v289
  %v300 = vpack.c.bf16 %v292, %v291
  %v301 = vld [vmem:[%s3] sm:$0xf]
  %v302 = vld [vmem:[%s3 + $0x4] sm:$0xf]
  %v303 = vld [vmem:[%s3 + $0x8] sm:$0xf]
  %v304 = vld [vmem:[%s3 + $0xc] sm:$0xf]
  %v305 = vld [vmem:[%s3 + $0x10] sm:$0xf]
  %v306 = vld [vmem:[%s3 + $0x14] sm:$0xf]
  %v307 = vld [vmem:[%s3 + $0x18] sm:$0xf]
  %v308 = vld [vmem:[%s3 + $0x1c] sm:$0xf]
  %v309 = vld [vmem:[%s3 + $0x20] sm:$0xf]
  %v310 = vld [vmem:[%s3 + $0x24] sm:$0xf]
  %v311 = vld [vmem:[%s3 + $0x28] sm:$0xf]
  %v312 = vld [vmem:[%s3 + $0x2c] sm:$0xf]
  %v313 = vld [vmem:[%s3 + $0x30] sm:$0xf]
  %v314 = vld [vmem:[%s3 + $0x34] sm:$0xf]
  %v315 = vld [vmem:[%s3 + $0x38] sm:$0xf]
  %v316 = vld [vmem:[%s3 + $0x3c] sm:$0xf]
  %v317 = vld [vmem:[%s4] sm:$0x1]
  %v319 = vlaneseq
  %v320 = vshrl.u32 %v319, 7
  %v321 = vsub.s32 0, %v320
  %v322 = vrot.slane %v317, %v321
  %v340 = vunpack.c.l.b16 %v301
  %v341 = vunpack.c.l.b16 %v302
  %v342 = vunpack.c.l.b16 %v303
  %v343 = vunpack.c.l.b16 %v304
  %v344 = vunpack.c.l.b16 %v305
  %v345 = vunpack.c.l.b16 %v306
  %v346 = vunpack.c.l.b16 %v307
  %v347 = vunpack.c.l.b16 %v308
  %v348 = vunpack.c.l.b16 %v309
  %v349 = vunpack.c.l.b16 %v310
  %v350 = vunpack.c.l.b16 %v311
  %v351 = vunpack.c.l.b16 %v312
  %v352 = vunpack.c.l.b16 %v313
  %v353 = vunpack.c.l.b16 %v314
  %v354 = vunpack.c.l.b16 %v315
  %v355 = vunpack.c.l.b16 %v316
  %v356 = vpack.c.b16 %v341, %v340
  %v357 = vpack.c.b16 %v343, %v342
  %v358 = vpack.c.b16 %v345, %v344
  %v359 = vpack.c.b16 %v347, %v346
  %v360 = vpack.c.b16 %v349, %v348
  %v361 = vpack.c.b16 %v351, %v350
  %v362 = vpack.c.b16 %v353, %v352
  %v363 = vpack.c.b16 %v355, %v354
  %372 = vmatprep.subr.bf16.mxu0 0
  %373 = vmatpush1.bf16.msra.mxu0 %v356
  %374 = vmatprep.subr.bf16.mxu0 0
  %375 = vmatpush1.bf16.msra.mxu0 %v357
  %376 = vmatprep.subr.bf16.mxu0 0
  %377 = vmatpush1.bf16.msra.mxu0 %v358
  %378 = vmatprep.subr.bf16.mxu0 0
  %379 = vmatpush1.bf16.msra.mxu0 %v359
  %380 = vmatprep.subr.bf16.mxu0 0
  %381 = vmatpush1.bf16.msra.mxu0 %v360
  %382 = vmatprep.subr.bf16.mxu0 0
  %383 = vmatpush1.bf16.msra.mxu0 %v361
  %384 = vmatprep.subr.bf16.mxu0 0
  %385 = vmatpush1.bf16.msra.mxu0 %v362
  %386 = vmatprep.subr.bf16.mxu0 0
  %387 = vmatpush1.bf16.msra.mxu0 %v363
  %388 = vmatprep.subr.bf16.mxu0 0
  %389 = vmatpush1.bf16.msra.mxu0 0
  %390 = vmatprep.subr.bf16.mxu0 0
  %391 = vmatpush1.bf16.msra.mxu0 0
  %392 = vmatprep.subr.bf16.mxu0 0
  %393 = vmatpush1.bf16.msra.mxu0 0
  %394 = vmatprep.subr.bf16.mxu0 0
  %395 = vmatpush1.bf16.msra.mxu0 0
  %396 = vmatprep.subr.bf16.mxu0 0
  %397 = vmatpush1.bf16.msra.mxu0 0
  %398 = vmatprep.subr.bf16.mxu0 0
  %399 = vmatpush1.bf16.msra.mxu0 0
  %400 = vmatprep.subr.bf16.mxu0 0
  %401 = vmatpush1.bf16.msra.mxu0 0
  %402 = vmatprep.subr.bf16.mxu0 0
  %403 = vmatpush1.bf16.msra.mxu0 0
  %404 = vmatprep.mubr.bf16.mxu0 0
  %405 = vmatmul.mubr.bf16.gmra.mrb[0].mxu0 %v293
  %v406 = vpop.f32.mrb[0].mxu0
  %v407 = vadd.f32 %v322, %v406
  %v408 = vpop.f32.mrb[0].mxu0
  %v409 = vpop.f32.mrb[0].mxu0
  %v410 = vadd.f32 %v322, %v409
  %v411 = vpop.f32.mrb[0].mxu0
  %412 = vmatprep.mubr.bf16.mxu0 0
  %413 = vmatmul.mubr.bf16.gmra.mrb[0].mxu0 %v294
  %v414 = vpop.f32.mrb[0].mxu0
  %v415 = vadd.f32 %v322, %v414
  %v416 = vpop.f32.mrb[0].mxu0
  %v417 = vpop.f32.mrb[0].mxu0
  %v418 = vadd.f32 %v322, %v417
  %v419 = vpop.f32.mrb[0].mxu0
  %420 = vmatprep.mubr.bf16.mxu0 0
  %421 = vmatmul.mubr.bf16.gmra.mrb[0].mxu0 %v295
  %v422 = vpop.f32.mrb[0].mxu0
  %v423 = vadd.f32 %v322, %v422
  %v424 = vpop.f32.mrb[0].mxu0
  %v425 = vpop.f32.mrb[0].mxu0
  %v426 = vadd.f32 %v322, %v425
  %v427 = vpop.f32.mrb[0].mxu0
  %428 = vmatprep.mubr.bf16.mxu0 0
  %429 = vmatmul.mubr.bf16.gmra.mrb[0].mxu0 %v296
  %v430 = vpop.f32.mrb[0].mxu0
  %v431 = vadd.f32 %v322, %v430
  %v432 = vpop.f32.mrb[0].mxu0
  %v433 = vpop.f32.mrb[0].mxu0
  %v434 = vadd.f32 %v322, %v433
  %v435 = vpop.f32.mrb[0].mxu0
  %436 = vmatprep.mubr.bf16.mxu0 0
  %437 = vmatmul.mubr.bf16.gmra.mrb[0].mxu0 %v297
  %v438 = vpop.f32.mrb[0].mxu0
  %v439 = vadd.f32 %v322, %v438
  %v440 = vpop.f32.mrb[0].mxu0
  %v441 = vpop.f32.mrb[0].mxu0
  %v442 = vadd.f32 %v322, %v441
  %v443 = vpop.f32.mrb[0].mxu0
  %444 = vmatprep.mubr.bf16.mxu0 0
  %445 = vmatmul.mubr.bf16.gmra.mrb[0].mxu0 %v298
  %v446 = vpop.f32.mrb[0].mxu0
  %v447 = vadd.f32 %v322, %v446
  %v448 = vpop.f32.mrb[0].mxu0
  %v449 = vpop.f32.mrb[0].mxu0
  %v450 = vadd.f32 %v322, %v449
  %v451 = vpop.f32.mrb[0].mxu0
  %452 = vmatprep.mubr.bf16.mxu0 0
  %453 = vmatmul.mubr.bf16.gmra.mrb[0].mxu0 %v299
  %v454 = vpop.f32.mrb[0].mxu0
  %v455 = vadd.f32 %v322, %v454
  %v456 = vpop.f32.mrb[0].mxu0
  %v457 = vpop.f32.mrb[0].mxu0
  %v458 = vadd.f32 %v322, %v457
  %v459 = vpop.f32.mrb[0].mxu0
  %460 = vmatprep.mubr.bf16.mxu0 0
  %461 = vmatmul.mubr.bf16.gmra.mrb[0].mxu0 %v300
  %v462 = vpop.f32.mrb[0].mxu0
  %v463 = vadd.f32 %v322, %v462
  %v464 = vpop.f32.mrb[0].mxu0
  %v465 = vpop.f32.mrb[0].mxu0
  %v466 = vadd.f32 %v322, %v465
  %v467 = vpop.f32.mrb[0].mxu0
  %468 = vdwg.mxu0
  %vm469 = vcmp.gt.f32.partialorder %v407, 0.0
  %vm470 = vcmp.gt.f32.partialorder %v410, 0.0
  %vm471 = vcmp.gt.f32.partialorder %v415, 0.0
  %vm472 = vcmp.gt.f32.partialorder %v418, 0.0
  %vm473 = vcmp.gt.f32.partialorder %v423, 0.0
  %vm474 = vcmp.gt.f32.partialorder %v426, 0.0
  %vm475 = vcmp.gt.f32.partialorder %v431, 0.0
  %vm476 = vcmp.gt.f32.partialorder %v434, 0.0
  %vm477 = vcmp.gt.f32.partialorder %v439, 0.0
  %vm478 = vcmp.gt.f32.partialorder %v442, 0.0
  %vm479 = vcmp.gt.f32.partialorder %v447, 0.0
  %vm480 = vcmp.gt.f32.partialorder %v450, 0.0
  %vm481 = vcmp.gt.f32.partialorder %v455, 0.0
  %vm482 = vcmp.gt.f32.partialorder %v458, 0.0
  %vm483 = vcmp.gt.f32.partialorder %v463, 0.0
  %vm484 = vcmp.gt.f32.partialorder %v466, 0.0
  %v485 = vmin.f32 %v407, 0.0
  %v486 = vmin.f32 %v410, 0.0
  %v487 = vmin.f32 %v415, 0.0
  %v488 = vmin.f32 %v418, 0.0
  %v489 = vmin.f32 %v423, 0.0
  %v490 = vmin.f32 %v426, 0.0
  %v491 = vmin.f32 %v431, 0.0
  %v492 = vmin.f32 %v434, 0.0
  %v493 = vmin.f32 %v439, 0.0
  %v494 = vmin.f32 %v442, 0.0
  %v495 = vmin.f32 %v447, 0.0
  %v496 = vmin.f32 %v450, 0.0
  %v497 = vmin.f32 %v455, 0.0
  %v498 = vmin.f32 %v458, 0.0
  %v499 = vmin.f32 %v463, 0.0
  %v500 = vmin.f32 %v466, 0.0
  %v501 = vmul.f32 %v485, 1.442695
  %v502 = vpow.pop %v501
  %v503 = vmul.f32 %v486, 1.442695
  %v504 = vpow.pop %v503
  %v505 = vmul.f32 %v487, 1.442695
  %v506 = vpow.pop %v505
  %v507 = vmul.f32 %v488, 1.442695
  %v508 = vpow.pop %v507
  %v509 = vmul.f32 %v489, 1.442695
  %v510 = vpow.pop %v509
  %v511 = vmul.f32 %v490, 1.442695
  %v512 = vpow.pop %v511
  %v513 = vmul.f32 %v491, 1.442695
  %v514 = vpow.pop %v513
  %v515 = vmul.f32 %v492, 1.442695
  %v516 = vpow.pop %v515
  %v517 = vmul.f32 %v493, 1.442695
  %v518 = vpow.pop %v517
  %v519 = vmul.f32 %v494, 1.442695
  %v520 = vpow.pop %v519
  %v521 = vmul.f32 %v495, 1.442695
  %v522 = vpow.pop %v521
  %v523 = vmul.f32 %v496, 1.442695
  %v524 = vpow.pop %v523
  %v525 = vmul.f32 %v497, 1.442695
  %v526 = vpow.pop %v525
  %v527 = vmul.f32 %v498, 1.442695
  %v528 = vpow.pop %v527
  %v529 = vmul.f32 %v499, 1.442695
  %v530 = vpow.pop %v529
  %v531 = vmul.f32 %v500, 1.442695
  %v532 = vpow.pop %v531
  %v533 = vsub.f32 %v502, 1.0
  %v534 = vsub.f32 %v504, 1.0
  %v535 = vsub.f32 %v506, 1.0
  %v536 = vsub.f32 %v508, 1.0
  %v537 = vsub.f32 %v510, 1.0
  %v538 = vsub.f32 %v512, 1.0
  %v539 = vsub.f32 %v514, 1.0
  %v540 = vsub.f32 %v516, 1.0
  %v541 = vsub.f32 %v518, 1.0
  %v542 = vsub.f32 %v520, 1.0
  %v543 = vsub.f32 %v522, 1.0
  %v544 = vsub.f32 %v524, 1.0
  %v545 = vsub.f32 %v526, 1.0
  %v546 = vsub.f32 %v528, 1.0
  %v547 = vsub.f32 %v530, 1.0
  %v548 = vsub.f32 %v532, 1.0
  %v549 = vsel %vm469, %v407, %v533
  %v550 = vsel %vm470, %v410, %v534
  %v551 = vsel %vm471, %v415, %v535
  %v552 = vsel %vm472, %v418, %v536
  %v553 = vsel %vm473, %v423, %v537
  %v554 = vsel %vm474, %v426, %v538
  %v555 = vsel %vm475, %v431, %v539
  %v556 = vsel %vm476, %v434, %v540
  %v557 = vsel %vm477, %v439, %v541
  %v558 = vsel %vm478, %v442, %v542
  %v559 = vsel %vm479, %v447, %v543
  %v560 = vsel %vm480, %v450, %v544
  %v561 = vsel %vm481, %v455, %v545
  %v562 = vsel %vm482, %v458, %v546
  %v563 = vsel %vm483, %v463, %v547
  %v564 = vsel %vm484, %v466, %v548
  %v565 = vpack.c.bf16 %v550, %v549
  %v566 = vpack.c.bf16 %v552, %v551
  %v567 = vpack.c.bf16 %v554, %v553
  %v568 = vpack.c.bf16 %v556, %v555
  %v569 = vpack.c.bf16 %v558, %v557
  %v570 = vpack.c.bf16 %v560, %v559
  %v571 = vpack.c.bf16 %v562, %v561
  %v572 = vpack.c.bf16 %v564, %v563
  %v573 = vld [vmem:[%s5] sm:$0xf]
  %v574 = vld [vmem:[%s5 + $0x4] sm:$0xf]
  %v575 = vld [vmem:[%s5 + $0x8] sm:$0xf]
  %v576 = vld [vmem:[%s5 + $0xc] sm:$0xf]
  %v577 = vld [vmem:[%s5 + $0x10] sm:$0xf]
  %v578 = vld [vmem:[%s5 + $0x14] sm:$0xf]
  %v579 = vld [vmem:[%s5 + $0x18] sm:$0xf]
  %v580 = vld [vmem:[%s5 + $0x1c] sm:$0xf]
  %v581 = vld [vmem:[%s5 + $0x20] sm:$0xf]
  %v582 = vld [vmem:[%s5 + $0x24] sm:$0xf]
  %v583 = vld [vmem:[%s5 + $0x28] sm:$0xf]
  %v584 = vld [vmem:[%s5 + $0x2c] sm:$0xf]
  %v585 = vld [vmem:[%s5 + $0x30] sm:$0xf]
  %v586 = vld [vmem:[%s5 + $0x34] sm:$0xf]
  %v587 = vld [vmem:[%s5 + $0x38] sm:$0xf]
  %v588 = vld [vmem:[%s5 + $0x3c] sm:$0xf]
  %v589 = vld [vmem:[%s6] sm:$0x1]
  %v591 = vlaneseq
  %v592 = vshrl.u32 %v591, 7
  %v593 = vsub.s32 0, %v592
  %v594 = vrot.slane %v589, %v593
  %v612 = vunpack.c.l.b16 %v573
  %v613 = vunpack.c.l.b16 %v574
  %v614 = vunpack.c.l.b16 %v575
  %v615 = vunpack.c.l.b16 %v576
  %v616 = vunpack.c.l.b16 %v577
  %v617 = vunpack.c.l.b16 %v578
  %v618 = vunpack.c.l.b16 %v579
  %v619 = vunpack.c.l.b16 %v580
  %v620 = vunpack.c.l.b16 %v581
  %v621 = vunpack.c.l.b16 %v582
  %v622 = vunpack.c.l.b16 %v583
  %v623 = vunpack.c.l.b16 %v584
  %v624 = vunpack.c.l.b16 %v585
  %v625 = vunpack.c.l.b16 %v586
  %v626 = vunpack.c.l.b16 %v587
  %v627 = vunpack.c.l.b16 %v588
  %v628 = vpack.c.b16 %v613, %v612
  %v629 = vpack.c.b16 %v615, %v614
  %v630 = vpack.c.b16 %v617, %v616
  %v631 = vpack.c.b16 %v619, %v618
  %v632 = vpack.c.b16 %v621, %v620
  %v633 = vpack.c.b16 %v623, %v622
  %v634 = vpack.c.b16 %v625, %v624
  %v635 = vpack.c.b16 %v627, %v626
  %644 = vmatprep.subr.bf16.mxu0 0
  %645 = vmatpush1.bf16.msra.mxu0 %v628
  %646 = vmatprep.subr.bf16.mxu0 0
  %647 = vmatpush1.bf16.msra.mxu0 %v629
  %648 = vmatprep.subr.bf16.mxu0 0
  %649 = vmatpush1.bf16.msra.mxu0 %v630
  %650 = vmatprep.subr.bf16.mxu0 0
  %651 = vmatpush1.bf16.msra.mxu0 %v631
  %652 = vmatprep.subr.bf16.mxu0 0
  %653 = vmatpush1.bf16.msra.mxu0 %v632
  %654 = vmatprep.subr.bf16.mxu0 0
  %655 = vmatpush1.bf16.msra.mxu0 %v633
  %656 = vmatprep.subr.bf16.mxu0 0
  %657 = vmatpush1.bf16.msra.mxu0 %v634
  %658 = vmatprep.subr.bf16.mxu0 0
  %659 = vmatpush1.bf16.msra.mxu0 %v635
  %660 = vmatprep.subr.bf16.mxu0 0
  %661 = vmatpush1.bf16.msra.mxu0 0
  %662 = vmatprep.subr.bf16.mxu0 0
  %663 = vmatpush1.bf16.msra.mxu0 0
  %664 = vmatprep.subr.bf16.mxu0 0
  %665 = vmatpush1.bf16.msra.mxu0 0
  %666 = vmatprep.subr.bf16.mxu0 0
  %667 = vmatpush1.bf16.msra.mxu0 0
  %668 = vmatprep.subr.bf16.mxu0 0
  %669 = vmatpush1.bf16.msra.mxu0 0
  %670 = vmatprep.subr.bf16.mxu0 0
  %671 = vmatpush1.bf16.msra.mxu0 0
  %672 = vmatprep.subr.bf16.mxu0 0
  %673 = vmatpush1.bf16.msra.mxu0 0
  %674 = vmatprep.subr.bf16.mxu0 0
  %675 = vmatpush1.bf16.msra.mxu0 0
  %676 = vmatprep.mubr.bf16.mxu0 0
  %677 = vmatmul.mubr.bf16.gmra.mrb[0].mxu0 %v565
  %v678 = vpop.f32.mrb[0].mxu0
  %v679 = vadd.f32 %v594, %v678
  %v680 = vpop.f32.mrb[0].mxu0
  %v681 = vpop.f32.mrb[0].mxu0
  %v682 = vadd.f32 %v594, %v681
  %v683 = vpop.f32.mrb[0].mxu0
  %684 = vmatprep.mubr.bf16.mxu0 0
  %685 = vmatmul.mubr.bf16.gmra.mrb[0].mxu0 %v566
  %v686 = vpop.f32.mrb[0].mxu0
  %v687 = vadd.f32 %v594, %v686
  %v688 = vpop.f32.mrb[0].mxu0
  %v689 = vpop.f32.mrb[0].mxu0
  %v690 = vadd.f32 %v594, %v689
  %v691 = vpop.f32.mrb[0].mxu0
  %692 = vmatprep.mubr.bf16.mxu0 0
  %693 = vmatmul.mubr.bf16.gmra.mrb[0].mxu0 %v567
  %v694 = vpop.f32.mrb[0].mxu0
  %v695 = vadd.f32 %v594, %v694
  %v696 = vpop.f32.mrb[0].mxu0
  %v697 = vpop.f32.mrb[0].mxu0
  %v698 = vadd.f32 %v594, %v697
  %v699 = vpop.f32.mrb[0].mxu0
  %700 = vmatprep.mubr.bf16.mxu0 0
  %701 = vmatmul.mubr.bf16.gmra.mrb[0].mxu0 %v568
  %v702 = vpop.f32.mrb[0].mxu0
  %v703 = vadd.f32 %v594, %v702
  %v704 = vpop.f32.mrb[0].mxu0
  %v705 = vpop.f32.mrb[0].mxu0
  %v706 = vadd.f32 %v594, %v705
  %v707 = vpop.f32.mrb[0].mxu0
  %708 = vmatprep.mubr.bf16.mxu0 0
  %709 = vmatmul.mubr.bf16.gmra.mrb[0].mxu0 %v569
  %v710 = vpop.f32.mrb[0].mxu0
  %v711 = vadd.f32 %v594, %v710
  %v712 = vpop.f32.mrb[0].mxu0
  %v713 = vpop.f32.mrb[0].mxu0
  %v714 = vadd.f32 %v594, %v713
  %v715 = vpop.f32.mrb[0].mxu0
  %716 = vmatprep.mubr.bf16.mxu0 0
  %717 = vmatmul.mubr.bf16.gmra.mrb[0].mxu0 %v570
  %v718 = vpop.f32.mrb[0].mxu0
  %v719 = vadd.f32 %v594, %v718
  %v720 = vpop.f32.mrb[0].mxu0
  %v721 = vpop.f32.mrb[0].mxu0
  %v722 = vadd.f32 %v594, %v721
  %v723 = vpop.f32.mrb[0].mxu0
  %724 = vmatprep.mubr.bf16.mxu0 0
  %725 = vmatmul.mubr.bf16.gmra.mrb[0].mxu0 %v571
  %v726 = vpop.f32.mrb[0].mxu0
  %v727 = vadd.f32 %v594, %v726
  %v728 = vpop.f32.mrb[0].mxu0
  %v729 = vpop.f32.mrb[0].mxu0
  %v730 = vadd.f32 %v594, %v729
  %v731 = vpop.f32.mrb[0].mxu0
  %732 = vmatprep.mubr.bf16.mxu0 0
  %733 = vmatmul.mubr.bf16.gmra.mrb[0].mxu0 %v572
  %v734 = vpop.f32.mrb[0].mxu0
  %v735 = vadd.f32 %v594, %v734
  %v736 = vpop.f32.mrb[0].mxu0
  %v737 = vpop.f32.mrb[0].mxu0
  %v738 = vadd.f32 %v594, %v737
  %v739 = vpop.f32.mrb[0].mxu0
  %740 = vdwg.mxu0
  %vm741 = vcmp.gt.f32.partialorder %v679, 0.0
  %vm742 = vcmp.gt.f32.partialorder %v682, 0.0
  %vm743 = vcmp.gt.f32.partialorder %v687, 0.0
  %vm744 = vcmp.gt.f32.partialorder %v690, 0.0
  %vm745 = vcmp.gt.f32.partialorder %v695, 0.0
  %vm746 = vcmp.gt.f32.partialorder %v698, 0.0
  %vm747 = vcmp.gt.f32.partialorder %v703, 0.0
  %vm748 = vcmp.gt.f32.partialorder %v706, 0.0
  %vm749 = vcmp.gt.f32.partialorder %v711, 0.0
  %vm750 = vcmp.gt.f32.partialorder %v714, 0.0
  %vm751 = vcmp.gt.f32.partialorder %v719, 0.0
  %vm752 = vcmp.gt.f32.partialorder %v722, 0.0
  %vm753 = vcmp.gt.f32.partialorder %v727, 0.0
  %vm754 = vcmp.gt.f32.partialorder %v730, 0.0
  %vm755 = vcmp.gt.f32.partialorder %v735, 0.0
  %vm756 = vcmp.gt.f32.partialorder %v738, 0.0
  %v757 = vmin.f32 %v679, 0.0
  %v758 = vmin.f32 %v682, 0.0
  %v759 = vmin.f32 %v687, 0.0
  %v760 = vmin.f32 %v690, 0.0
  %v761 = vmin.f32 %v695, 0.0
  %v762 = vmin.f32 %v698, 0.0
  %v763 = vmin.f32 %v703, 0.0
  %v764 = vmin.f32 %v706, 0.0
  %v765 = vmin.f32 %v711, 0.0
  %v766 = vmin.f32 %v714, 0.0
  %v767 = vmin.f32 %v719, 0.0
  %v768 = vmin.f32 %v722, 0.0
  %v769 = vmin.f32 %v727, 0.0
  %v770 = vmin.f32 %v730, 0.0
  %v771 = vmin.f32 %v735, 0.0
  %v772 = vmin.f32 %v738, 0.0
  %v773 = vmul.f32 %v757, 1.442695
  %v774 = vpow.pop %v773
  %v775 = vmul.f32 %v758, 1.442695
  %v776 = vpow.pop %v775
  %v777 = vmul.f32 %v759, 1.442695
  %v778 = vpow.pop %v777
  %v779 = vmul.f32 %v760, 1.442695
  %v780 = vpow.pop %v779
  %v781 = vmul.f32 %v761, 1.442695
  %v782 = vpow.pop %v781
  %v783 = vmul.f32 %v762, 1.442695
  %v784 = vpow.pop %v783
  %v785 = vmul.f32 %v763, 1.442695
  %v786 = vpow.pop %v785
  %v787 = vmul.f32 %v764, 1.442695
  %v788 = vpow.pop %v787
  %v789 = vmul.f32 %v765, 1.442695
  %v790 = vpow.pop %v789
  %v791 = vmul.f32 %v766, 1.442695
  %v792 = vpow.pop %v791
  %v793 = vmul.f32 %v767, 1.442695
  %v794 = vpow.pop %v793
  %v795 = vmul.f32 %v768, 1.442695
  %v796 = vpow.pop %v795
  %v797 = vmul.f32 %v769, 1.442695
  %v798 = vpow.pop %v797
  %v799 = vmul.f32 %v770, 1.442695
  %v800 = vpow.pop %v799
  %v801 = vmul.f32 %v771, 1.442695
  %v802 = vpow.pop %v801
  %v803 = vmul.f32 %v772, 1.442695
  %v804 = vpow.pop %v803
  %v805 = vsub.f32 %v774, 1.0
  %v806 = vsub.f32 %v776, 1.0
  %v807 = vsub.f32 %v778, 1.0
  %v808 = vsub.f32 %v780, 1.0
  %v809 = vsub.f32 %v782, 1.0
  %v810 = vsub.f32 %v784, 1.0
  %v811 = vsub.f32 %v786, 1.0
  %v812 = vsub.f32 %v788, 1.0
  %v813 = vsub.f32 %v790, 1.0
  %v814 = vsub.f32 %v792, 1.0
  %v815 = vsub.f32 %v794, 1.0
  %v816 = vsub.f32 %v796, 1.0
  %v817 = vsub.f32 %v798, 1.0
  %v818 = vsub.f32 %v800, 1.0
  %v819 = vsub.f32 %v802, 1.0
  %v820 = vsub.f32 %v804, 1.0
  %v821 = vsel %vm741, %v679, %v805
  %v822 = vsel %vm742, %v682, %v806
  %v823 = vsel %vm743, %v687, %v807
  %v824 = vsel %vm744, %v690, %v808
  %v825 = vsel %vm745, %v695, %v809
  %v826 = vsel %vm746, %v698, %v810
  %v827 = vsel %vm747, %v703, %v811
  %v828 = vsel %vm748, %v706, %v812
  %v829 = vsel %vm749, %v711, %v813
  %v830 = vsel %vm750, %v714, %v814
  %v831 = vsel %vm751, %v719, %v815
  %v832 = vsel %vm752, %v722, %v816
  %v833 = vsel %vm753, %v727, %v817
  %v834 = vsel %vm754, %v730, %v818
  %v835 = vsel %vm755, %v735, %v819
  %v836 = vsel %vm756, %v738, %v820
  %v837 = vpack.c.bf16 %v822, %v821
  %v838 = vpack.c.bf16 %v824, %v823
  %v839 = vpack.c.bf16 %v826, %v825
  %v840 = vpack.c.bf16 %v828, %v827
  %v841 = vpack.c.bf16 %v830, %v829
  %v842 = vpack.c.bf16 %v832, %v831
  %v843 = vpack.c.bf16 %v834, %v833
  %v844 = vpack.c.bf16 %v836, %v835
  %v845 = vld [vmem:[%s7] sm:$0xf]
  %v846 = vld [vmem:[%s7 + $0x4] sm:$0xf]
  %v847 = vld [vmem:[%s7 + $0x8] sm:$0xf]
  %v848 = vld [vmem:[%s7 + $0xc] sm:$0xf]
  %v849 = vld [vmem:[%s7 + $0x10] sm:$0xf]
  %v850 = vld [vmem:[%s7 + $0x14] sm:$0xf]
  %v851 = vld [vmem:[%s7 + $0x18] sm:$0xf]
  %v852 = vld [vmem:[%s7 + $0x1c] sm:$0xf]
  %v853 = vld [vmem:[%s7 + $0x20] sm:$0xf]
  %v854 = vld [vmem:[%s7 + $0x24] sm:$0xf]
  %v855 = vld [vmem:[%s7 + $0x28] sm:$0xf]
  %v856 = vld [vmem:[%s7 + $0x2c] sm:$0xf]
  %v857 = vld [vmem:[%s7 + $0x30] sm:$0xf]
  %v858 = vld [vmem:[%s7 + $0x34] sm:$0xf]
  %v859 = vld [vmem:[%s7 + $0x38] sm:$0xf]
  %v860 = vld [vmem:[%s7 + $0x3c] sm:$0xf]
  %v861 = vld [vmem:[%s8] sm:$0x1]
  %v863 = vlaneseq
  %v864 = vshrl.u32 %v863, 7
  %v865 = vsub.s32 0, %v864
  %v866 = vrot.slane %v861, %v865
  %v884 = vunpack.c.l.b16 %v845
  %v885 = vunpack.c.l.b16 %v846
  %v886 = vunpack.c.l.b16 %v847
  %v887 = vunpack.c.l.b16 %v848
  %v888 = vunpack.c.l.b16 %v849
  %v889 = vunpack.c.l.b16 %v850
  %v890 = vunpack.c.l.b16 %v851
  %v891 = vunpack.c.l.b16 %v852
  %v892 = vunpack.c.l.b16 %v853
  %v893 = vunpack.c.l.b16 %v854
  %v894 = vunpack.c.l.b16 %v855
  %v895 = vunpack.c.l.b16 %v856
  %v896 = vunpack.c.l.b16 %v857
  %v897 = vunpack.c.l.b16 %v858
  %v898 = vunpack.c.l.b16 %v859
  %v899 = vunpack.c.l.b16 %v860
  %v900 = vpack.c.b16 %v885, %v884
  %v901 = vpack.c.b16 %v887, %v886
  %v902 = vpack.c.b16 %v889, %v888
  %v903 = vpack.c.b16 %v891, %v890
  %v904 = vpack.c.b16 %v893, %v892
  %v905 = vpack.c.b16 %v895, %v894
  %v906 = vpack.c.b16 %v897, %v896
  %v907 = vpack.c.b16 %v899, %v898
  %916 = vmatprep.subr.bf16.mxu0 0
  %917 = vmatpush1.bf16.msra.mxu0 %v900
  %918 = vmatprep.subr.bf16.mxu0 0
  %919 = vmatpush1.bf16.msra.mxu0 %v901
  %920 = vmatprep.subr.bf16.mxu0 0
  %921 = vmatpush1.bf16.msra.mxu0 %v902
  %922 = vmatprep.subr.bf16.mxu0 0
  %923 = vmatpush1.bf16.msra.mxu0 %v903
  %924 = vmatprep.subr.bf16.mxu0 0
  %925 = vmatpush1.bf16.msra.mxu0 %v904
  %926 = vmatprep.subr.bf16.mxu0 0
  %927 = vmatpush1.bf16.msra.mxu0 %v905
  %928 = vmatprep.subr.bf16.mxu0 0
  %929 = vmatpush1.bf16.msra.mxu0 %v906
  %930 = vmatprep.subr.bf16.mxu0 0
  %931 = vmatpush1.bf16.msra.mxu0 %v907
  %932 = vmatprep.subr.bf16.mxu0 0
  %933 = vmatpush1.bf16.msra.mxu0 0
  %934 = vmatprep.subr.bf16.mxu0 0
  %935 = vmatpush1.bf16.msra.mxu0 0
  %936 = vmatprep.subr.bf16.mxu0 0
  %937 = vmatpush1.bf16.msra.mxu0 0
  %938 = vmatprep.subr.bf16.mxu0 0
  %939 = vmatpush1.bf16.msra.mxu0 0
  %940 = vmatprep.subr.bf16.mxu0 0
  %941 = vmatpush1.bf16.msra.mxu0 0
  %942 = vmatprep.subr.bf16.mxu0 0
  %943 = vmatpush1.bf16.msra.mxu0 0
  %944 = vmatprep.subr.bf16.mxu0 0
  %945 = vmatpush1.bf16.msra.mxu0 0
  %946 = vmatprep.subr.bf16.mxu0 0
  %947 = vmatpush1.bf16.msra.mxu0 0
  %948 = vmatprep.mubr.bf16.mxu0 0
  %949 = vmatmul.mubr.bf16.gmra.mrb[0].mxu0 %v837
  %v950 = vpop.f32.mrb[0].mxu0
  %v951 = vadd.f32 %v866, %v950
  %v952 = vpop.f32.mrb[0].mxu0
  %v953 = vpop.f32.mrb[0].mxu0
  %v954 = vadd.f32 %v866, %v953
  %v955 = vpop.f32.mrb[0].mxu0
  %956 = vmatprep.mubr.bf16.mxu0 0
  %957 = vmatmul.mubr.bf16.gmra.mrb[0].mxu0 %v838
  %v958 = vpop.f32.mrb[0].mxu0
  %v959 = vadd.f32 %v866, %v958
  %v960 = vpop.f32.mrb[0].mxu0
  %v961 = vpop.f32.mrb[0].mxu0
  %v962 = vadd.f32 %v866, %v961
  %v963 = vpop.f32.mrb[0].mxu0
  %964 = vmatprep.mubr.bf16.mxu0 0
  %965 = vmatmul.mubr.bf16.gmra.mrb[0].mxu0 %v839
  %v966 = vpop.f32.mrb[0].mxu0
  %v967 = vadd.f32 %v866, %v966
  %v968 = vpop.f32.mrb[0].mxu0
  %v969 = vpop.f32.mrb[0].mxu0
  %v970 = vadd.f32 %v866, %v969
  %v971 = vpop.f32.mrb[0].mxu0
  %972 = vmatprep.mubr.bf16.mxu0 0
  %973 = vmatmul.mubr.bf16.gmra.mrb[0].mxu0 %v840
  %v974 = vpop.f32.mrb[0].mxu0
  %v975 = vadd.f32 %v866, %v974
  %v976 = vpop.f32.mrb[0].mxu0
  %v977 = vpop.f32.mrb[0].mxu0
  %v978 = vadd.f32 %v866, %v977
  %v979 = vpop.f32.mrb[0].mxu0
  %980 = vmatprep.mubr.bf16.mxu0 0
  %981 = vmatmul.mubr.bf16.gmra.mrb[0].mxu0 %v841
  %v982 = vpop.f32.mrb[0].mxu0
  %v983 = vadd.f32 %v866, %v982
  %v984 = vpop.f32.mrb[0].mxu0
  %v985 = vpop.f32.mrb[0].mxu0
  %v986 = vadd.f32 %v866, %v985
  %v987 = vpop.f32.mrb[0].mxu0
  %988 = vmatprep.mubr.bf16.mxu0 0
  %989 = vmatmul.mubr.bf16.gmra.mrb[0].mxu0 %v842
  %v990 = vpop.f32.mrb[0].mxu0
  %v991 = vadd.f32 %v866, %v990
  %v992 = vpop.f32.mrb[0].mxu0
  %v993 = vpop.f32.mrb[0].mxu0
  %v994 = vadd.f32 %v866, %v993
  %v995 = vpop.f32.mrb[0].mxu0
  %996 = vmatprep.mubr.bf16.mxu0 0
  %997 = vmatmul.mubr.bf16.gmra.mrb[0].mxu0 %v843
  %v998 = vpop.f32.mrb[0].mxu0
  %v999 = vadd.f32 %v866, %v998
  %v1000 = vpop.f32.mrb[0].mxu0
  %v1001 = vpop.f32.mrb[0].mxu0
  %v1002 = vadd.f32 %v866, %v1001
  %v1003 = vpop.f32.mrb[0].mxu0
  %1004 = vmatprep.mubr.bf16.mxu0 0
  %1005 = vmatmul.mubr.bf16.gmra.mrb[0].mxu0 %v844
  %v1006 = vpop.f32.mrb[0].mxu0
  %v1007 = vadd.f32 %v866, %v1006
  %v1008 = vpop.f32.mrb[0].mxu0
  %v1009 = vpop.f32.mrb[0].mxu0
  %v1010 = vadd.f32 %v866, %v1009
  %v1011 = vpop.f32.mrb[0].mxu0
  %1012 = vdwg.mxu0
  %vm1013 = vcmp.gt.f32.partialorder %v951, 0.0
  %vm1014 = vcmp.gt.f32.partialorder %v954, 0.0
  %vm1015 = vcmp.gt.f32.partialorder %v959, 0.0
  %vm1016 = vcmp.gt.f32.partialorder %v962, 0.0
  %vm1017 = vcmp.gt.f32.partialorder %v967, 0.0
  %vm1018 = vcmp.gt.f32.partialorder %v970, 0.0
  %vm1019 = vcmp.gt.f32.partialorder %v975, 0.0
  %vm1020 = vcmp.gt.f32.partialorder %v978, 0.0
  %vm1021 = vcmp.gt.f32.partialorder %v983, 0.0
  %vm1022 = vcmp.gt.f32.partialorder %v986, 0.0
  %vm1023 = vcmp.gt.f32.partialorder %v991, 0.0
  %vm1024 = vcmp.gt.f32.partialorder %v994, 0.0
  %vm1025 = vcmp.gt.f32.partialorder %v999, 0.0
  %vm1026 = vcmp.gt.f32.partialorder %v1002, 0.0
  %vm1027 = vcmp.gt.f32.partialorder %v1007, 0.0
  %vm1028 = vcmp.gt.f32.partialorder %v1010, 0.0
  %v1029 = vmin.f32 %v951, 0.0
  %v1030 = vmin.f32 %v954, 0.0
  %v1031 = vmin.f32 %v959, 0.0
  %v1032 = vmin.f32 %v962, 0.0
  %v1033 = vmin.f32 %v967, 0.0
  %v1034 = vmin.f32 %v970, 0.0
  %v1035 = vmin.f32 %v975, 0.0
  %v1036 = vmin.f32 %v978, 0.0
  %v1037 = vmin.f32 %v983, 0.0
  %v1038 = vmin.f32 %v986, 0.0
  %v1039 = vmin.f32 %v991, 0.0
  %v1040 = vmin.f32 %v994, 0.0
  %v1041 = vmin.f32 %v999, 0.0
  %v1042 = vmin.f32 %v1002, 0.0
  %v1043 = vmin.f32 %v1007, 0.0
  %v1044 = vmin.f32 %v1010, 0.0
  %v1045 = vmul.f32 %v1029, 1.442695
  %v1046 = vpow.pop %v1045
  %v1047 = vmul.f32 %v1030, 1.442695
  %v1048 = vpow.pop %v1047
  %v1049 = vmul.f32 %v1031, 1.442695
  %v1050 = vpow.pop %v1049
  %v1051 = vmul.f32 %v1032, 1.442695
  %v1052 = vpow.pop %v1051
  %v1053 = vmul.f32 %v1033, 1.442695
  %v1054 = vpow.pop %v1053
  %v1055 = vmul.f32 %v1034, 1.442695
  %v1056 = vpow.pop %v1055
  %v1057 = vmul.f32 %v1035, 1.442695
  %v1058 = vpow.pop %v1057
  %v1059 = vmul.f32 %v1036, 1.442695
  %v1060 = vpow.pop %v1059
  %v1061 = vmul.f32 %v1037, 1.442695
  %v1062 = vpow.pop %v1061
  %v1063 = vmul.f32 %v1038, 1.442695
  %v1064 = vpow.pop %v1063
  %v1065 = vmul.f32 %v1039, 1.442695
  %v1066 = vpow.pop %v1065
  %v1067 = vmul.f32 %v1040, 1.442695
  %v1068 = vpow.pop %v1067
  %v1069 = vmul.f32 %v1041, 1.442695
  %v1070 = vpow.pop %v1069
  %v1071 = vmul.f32 %v1042, 1.442695
  %v1072 = vpow.pop %v1071
  %v1073 = vmul.f32 %v1043, 1.442695
  %v1074 = vpow.pop %v1073
  %v1075 = vmul.f32 %v1044, 1.442695
  %v1076 = vpow.pop %v1075
  %v1077 = vsub.f32 %v1046, 1.0
  %v1078 = vsub.f32 %v1048, 1.0
  %v1079 = vsub.f32 %v1050, 1.0
  %v1080 = vsub.f32 %v1052, 1.0
  %v1081 = vsub.f32 %v1054, 1.0
  %v1082 = vsub.f32 %v1056, 1.0
  %v1083 = vsub.f32 %v1058, 1.0
  %v1084 = vsub.f32 %v1060, 1.0
  %v1085 = vsub.f32 %v1062, 1.0
  %v1086 = vsub.f32 %v1064, 1.0
  %v1087 = vsub.f32 %v1066, 1.0
  %v1088 = vsub.f32 %v1068, 1.0
  %v1089 = vsub.f32 %v1070, 1.0
  %v1090 = vsub.f32 %v1072, 1.0
  %v1091 = vsub.f32 %v1074, 1.0
  %v1092 = vsub.f32 %v1076, 1.0
  %v1093 = vsel %vm1013, %v951, %v1077
  %v1094 = vsel %vm1014, %v954, %v1078
  %v1095 = vsel %vm1015, %v959, %v1079
  %v1096 = vsel %vm1016, %v962, %v1080
  %v1097 = vsel %vm1017, %v967, %v1081
  %v1098 = vsel %vm1018, %v970, %v1082
  %v1099 = vsel %vm1019, %v975, %v1083
  %v1100 = vsel %vm1020, %v978, %v1084
  %v1101 = vsel %vm1021, %v983, %v1085
  %v1102 = vsel %vm1022, %v986, %v1086
  %v1103 = vsel %vm1023, %v991, %v1087
  %v1104 = vsel %vm1024, %v994, %v1088
  %v1105 = vsel %vm1025, %v999, %v1089
  %v1106 = vsel %vm1026, %v1002, %v1090
  %v1107 = vsel %vm1027, %v1007, %v1091
  %v1108 = vsel %vm1028, %v1010, %v1092
  %v1109 = vpack.c.bf16 %v1094, %v1093
  %v1110 = vpack.c.bf16 %v1096, %v1095
  %v1111 = vpack.c.bf16 %v1098, %v1097
  %v1112 = vpack.c.bf16 %v1100, %v1099
  %v1113 = vpack.c.bf16 %v1102, %v1101
  %v1114 = vpack.c.bf16 %v1104, %v1103
  %v1115 = vpack.c.bf16 %v1106, %v1105
  %v1116 = vpack.c.bf16 %v1108, %v1107
  %v1117 = vld [vmem:[%s9] sm:$0xf]
  %v1118 = vld [vmem:[%s9 + $0x4] sm:$0xf]
  %v1119 = vld [vmem:[%s9 + $0x8] sm:$0xf]
  %v1120 = vld [vmem:[%s9 + $0xc] sm:$0xf]
  %v1121 = vld [vmem:[%s9 + $0x10] sm:$0xf]
  %v1122 = vld [vmem:[%s9 + $0x14] sm:$0xf]
  %v1123 = vld [vmem:[%s9 + $0x18] sm:$0xf]
  %v1124 = vld [vmem:[%s9 + $0x1c] sm:$0xf]
  %v1125 = vld [vmem:[%s9 + $0x20] sm:$0xf]
  %v1126 = vld [vmem:[%s9 + $0x24] sm:$0xf]
  %v1127 = vld [vmem:[%s9 + $0x28] sm:$0xf]
  %v1128 = vld [vmem:[%s9 + $0x2c] sm:$0xf]
  %v1129 = vld [vmem:[%s9 + $0x30] sm:$0xf]
  %v1130 = vld [vmem:[%s9 + $0x34] sm:$0xf]
  %v1131 = vld [vmem:[%s9 + $0x38] sm:$0xf]
  %v1132 = vld [vmem:[%s9 + $0x3c] sm:$0xf]
  %v1133 = vld [vmem:[%s10] sm:$0x1]
  %v1135 = vlaneseq
  %v1136 = vshrl.u32 %v1135, 7
  %v1137 = vsub.s32 0, %v1136
  %v1138 = vrot.slane %v1133, %v1137
  %v1156 = vunpack.c.l.b16 %v1117
  %v1157 = vunpack.c.l.b16 %v1118
  %v1158 = vunpack.c.l.b16 %v1119
  %v1159 = vunpack.c.l.b16 %v1120
  %v1160 = vunpack.c.l.b16 %v1121
  %v1161 = vunpack.c.l.b16 %v1122
  %v1162 = vunpack.c.l.b16 %v1123
  %v1163 = vunpack.c.l.b16 %v1124
  %v1164 = vunpack.c.l.b16 %v1125
  %v1165 = vunpack.c.l.b16 %v1126
  %v1166 = vunpack.c.l.b16 %v1127
  %v1167 = vunpack.c.l.b16 %v1128
  %v1168 = vunpack.c.l.b16 %v1129
  %v1169 = vunpack.c.l.b16 %v1130
  %v1170 = vunpack.c.l.b16 %v1131
  %v1171 = vunpack.c.l.b16 %v1132
  %v1172 = vpack.c.b16 %v1157, %v1156
  %v1173 = vpack.c.b16 %v1159, %v1158
  %v1174 = vpack.c.b16 %v1161, %v1160
  %v1175 = vpack.c.b16 %v1163, %v1162
  %v1176 = vpack.c.b16 %v1165, %v1164
  %v1177 = vpack.c.b16 %v1167, %v1166
  %v1178 = vpack.c.b16 %v1169, %v1168
  %v1179 = vpack.c.b16 %v1171, %v1170
  %1188 = vmatprep.subr.bf16.mxu0 0
  %1189 = vmatpush1.bf16.msra.mxu0 %v1172
  %1190 = vmatprep.subr.bf16.mxu0 0
  %1191 = vmatpush1.bf16.msra.mxu0 %v1173
  %1192 = vmatprep.subr.bf16.mxu0 0
  %1193 = vmatpush1.bf16.msra.mxu0 %v1174
  %1194 = vmatprep.subr.bf16.mxu0 0
  %1195 = vmatpush1.bf16.msra.mxu0 %v1175
  %1196 = vmatprep.subr.bf16.mxu0 0
  %1197 = vmatpush1.bf16.msra.mxu0 %v1176
  %1198 = vmatprep.subr.bf16.mxu0 0
  %1199 = vmatpush1.bf16.msra.mxu0 %v1177
  %1200 = vmatprep.subr.bf16.mxu0 0
  %1201 = vmatpush1.bf16.msra.mxu0 %v1178
  %1202 = vmatprep.subr.bf16.mxu0 0
  %1203 = vmatpush1.bf16.msra.mxu0 %v1179
  %1204 = vmatprep.subr.bf16.mxu0 0
  %1205 = vmatpush1.bf16.msra.mxu0 0
  %1206 = vmatprep.subr.bf16.mxu0 0
  %1207 = vmatpush1.bf16.msra.mxu0 0
  %1208 = vmatprep.subr.bf16.mxu0 0
  %1209 = vmatpush1.bf16.msra.mxu0 0
  %1210 = vmatprep.subr.bf16.mxu0 0
  %1211 = vmatpush1.bf16.msra.mxu0 0
  %1212 = vmatprep.subr.bf16.mxu0 0
  %1213 = vmatpush1.bf16.msra.mxu0 0
  %1214 = vmatprep.subr.bf16.mxu0 0
  %1215 = vmatpush1.bf16.msra.mxu0 0
  %1216 = vmatprep.subr.bf16.mxu0 0
  %1217 = vmatpush1.bf16.msra.mxu0 0
  %1218 = vmatprep.subr.bf16.mxu0 0
  %1219 = vmatpush1.bf16.msra.mxu0 0
  %1220 = vmatprep.mubr.bf16.mxu0 0
  %1221 = vmatmul.mubr.bf16.gmra.mrb[0].mxu0 %v1109
  %v1222 = vpop.f32.mrb[0].mxu0
  %v1223 = vadd.f32 %v1138, %v1222
  %v1224 = vpop.f32.mrb[0].mxu0
  %v1225 = vpop.f32.mrb[0].mxu0
  %v1226 = vadd.f32 %v1138, %v1225
  %v1227 = vpop.f32.mrb[0].mxu0
  %1228 = vmatprep.mubr.bf16.mxu0 0
  %1229 = vmatmul.mubr.bf16.gmra.mrb[0].mxu0 %v1110
  %v1230 = vpop.f32.mrb[0].mxu0
  %v1231 = vadd.f32 %v1138, %v1230
  %v1232 = vpop.f32.mrb[0].mxu0
  %v1233 = vpop.f32.mrb[0].mxu0
  %v1234 = vadd.f32 %v1138, %v1233
  %v1235 = vpop.f32.mrb[0].mxu0
  %1236 = vmatprep.mubr.bf16.mxu0 0
  %1237 = vmatmul.mubr.bf16.gmra.mrb[0].mxu0 %v1111
  %v1238 = vpop.f32.mrb[0].mxu0
  %v1239 = vadd.f32 %v1138, %v1238
  %v1240 = vpop.f32.mrb[0].mxu0
  %v1241 = vpop.f32.mrb[0].mxu0
  %v1242 = vadd.f32 %v1138, %v1241
  %v1243 = vpop.f32.mrb[0].mxu0
  %1244 = vmatprep.mubr.bf16.mxu0 0
  %1245 = vmatmul.mubr.bf16.gmra.mrb[0].mxu0 %v1112
  %v1246 = vpop.f32.mrb[0].mxu0
  %v1247 = vadd.f32 %v1138, %v1246
  %v1248 = vpop.f32.mrb[0].mxu0
  %v1249 = vpop.f32.mrb[0].mxu0
  %v1250 = vadd.f32 %v1138, %v1249
  %v1251 = vpop.f32.mrb[0].mxu0
  %1252 = vmatprep.mubr.bf16.mxu0 0
  %1253 = vmatmul.mubr.bf16.gmra.mrb[0].mxu0 %v1113
  %v1254 = vpop.f32.mrb[0].mxu0
  %v1255 = vadd.f32 %v1138, %v1254
  %v1256 = vpop.f32.mrb[0].mxu0
  %v1257 = vpop.f32.mrb[0].mxu0
  %v1258 = vadd.f32 %v1138, %v1257
  %v1259 = vpop.f32.mrb[0].mxu0
  %1260 = vmatprep.mubr.bf16.mxu0 0
  %1261 = vmatmul.mubr.bf16.gmra.mrb[0].mxu0 %v1114
  %v1262 = vpop.f32.mrb[0].mxu0
  %v1263 = vadd.f32 %v1138, %v1262
  %v1264 = vpop.f32.mrb[0].mxu0
  %v1265 = vpop.f32.mrb[0].mxu0
  %v1266 = vadd.f32 %v1138, %v1265
  %v1267 = vpop.f32.mrb[0].mxu0
  %1268 = vmatprep.mubr.bf16.mxu0 0
  %1269 = vmatmul.mubr.bf16.gmra.mrb[0].mxu0 %v1115
  %v1270 = vpop.f32.mrb[0].mxu0
  %v1271 = vadd.f32 %v1138, %v1270
  %v1272 = vpop.f32.mrb[0].mxu0
  %v1273 = vpop.f32.mrb[0].mxu0
  %v1274 = vadd.f32 %v1138, %v1273
  %v1275 = vpop.f32.mrb[0].mxu0
  %1276 = vmatprep.mubr.bf16.mxu0 0
  %1277 = vmatmul.mubr.bf16.gmra.mrb[0].mxu0 %v1116
  %v1278 = vpop.f32.mrb[0].mxu0
  %v1279 = vadd.f32 %v1138, %v1278
  %v1280 = vpop.f32.mrb[0].mxu0
  %v1281 = vpop.f32.mrb[0].mxu0
  %v1282 = vadd.f32 %v1138, %v1281
  %v1283 = vpop.f32.mrb[0].mxu0
  %1284 = vdwg.mxu0
  %1285 = vst [vmem:[%s11] sm:$0xff] %v1223
  %1286 = vst [vmem:[%s11 + $0x8] sm:$0xff] %v1226
  %1287 = vst [vmem:[%s11 + $0x10] sm:$0xff] %v1231
  %1288 = vst [vmem:[%s11 + $0x18] sm:$0xff] %v1234
  %1289 = vst [vmem:[%s11 + $0x20] sm:$0xff] %v1239
  %1290 = vst [vmem:[%s11 + $0x28] sm:$0xff] %v1242
  %1291 = vst [vmem:[%s11 + $0x30] sm:$0xff] %v1247
  %1292 = vst [vmem:[%s11 + $0x38] sm:$0xff] %v1250
  %1293 = vst [vmem:[%s11 + $0x40] sm:$0xff] %v1255
  %1294 = vst [vmem:[%s11 + $0x48] sm:$0xff] %v1258
  %1295 = vst [vmem:[%s11 + $0x50] sm:$0xff] %v1263
  %1296 = vst [vmem:[%s11 + $0x58] sm:$0xff] %v1266
  %1297 = vst [vmem:[%s11 + $0x60] sm:$0xff] %v1271
  %1298 = vst [vmem:[%s11 + $0x68] sm:$0xff] %v1274
  %1299 = vst [vmem:[%s11 + $0x70] sm:$0xff] %v1279
  %1300 = vst [vmem:[%s11 + $0x78] sm:$0xff] %v1282
  // Predicated region
  $region46: #{decoder_forward.1} parent=0 // pred_check
    _
  $region47: #{decoder_forward.1} parent=0 // pred_check_branch
    %1302 = sbr.rel (0) target = $region49
  $region48: #{decoder_forward.1} parent=0 // pred_region
    _
  $region49: #{decoder_forward.1} parent=0 // pred_fallthru
    _
  // Predicated region
  $region50: #{decoder_forward.1} parent=0 // pred_check
    _
  $region51: #{decoder_forward.1} parent=0 // pred_check_branch
    %1304 = sbr.rel (0) target = $region53
  $region52: #{decoder_forward.1} parent=0 // pred_region
    _
  $region53: #{decoder_forward.1} parent=0 // pred_fallthru
    _

// kernel: decoder_forward.1
$region0: #{decoder_forward.1}
  #allocation0 [shape = 'u32[]', space=smem, size = 0x4, offset = 0x4, fixed_abs, tag = 'smem constant byte address 0x4 - core index']
  #allocation1 [shape = 'u32[144,128]{1,0:T(1,128)}', space=vmem, size = 0x12000, scoped, tag = 'internal scratch']
  %s0 = inlined_call_operand.vmem [shape: f32[128,8], index: 0, kind: input, shape index: {}]
  %s1 = inlined_call_operand.vmem [shape: bf16[8,128], index: 1, kind: input, shape index: {}]
  %s2 = inlined_call_operand.vmem [shape: f32[1,128], index: 2, kind: input, shape index: {}]
  %s3 = inlined_call_operand.vmem [shape: bf16[128,128], index: 3, kind: input, shape index: {}]
  %s4 = inlined_call_operand.vmem [shape: f32[1,128], index: 4, kind: input, shape index: {}]
  %s5 = inlined_call_operand.vmem [shape: bf16[128,128], index: 5, kind: input, shape index: {}]
  %s6 = inlined_call_operand.vmem [shape: f32[1,128], index: 6, kind: input, shape index: {}]
  %s7 = inlined_call_operand.vmem [shape: bf16[128,128], index: 7, kind: input, shape index: {}]
  %s8 = inlined_call_operand.vmem [shape: f32[1,128], index: 8, kind: input, shape index: {}]
  %s9 = inlined_call_operand.vmem [shape: bf16[128,128], index: 9, kind: input, shape index: {}]
  %s10 = inlined_call_operand.vmem [shape: f32[1,128], index: 10, kind: input, shape index: {}]
  %s11 = inlined_call_operand.vmem [shape: f32[128,128], index: 11, kind: output, shape index: {}]
  %s12 = sld [smem:[#allocation0]]
  $region54: #{decoder_forward.1} parent=0
    _
  %s14 = ssub.s32 1, %s12
  %s15 = scalar_select 0, %s14, %s12
  // Predicated region
  $region2: #{decoder_forward.1} parent=0 // pred_check
    _
  $region3: #{decoder_forward.1} parent=0 // pred_check_branch
    %17 = sbr.rel (0) target = $region5
  $region4: #{decoder_forward.1} parent=0 // pred_region
    _
  $region5: #{decoder_forward.1} parent=0 // pred_fallthru
    _
  // Predicated region
  $region6: #{decoder_forward.1} parent=0 // pred_check
    _
  $region7: #{decoder_forward.1} parent=0 // pred_check_branch
    %19 = sbr.rel (0) target = $region9
  $region8: #{decoder_forward.1} parent=0 // pred_region
    _
  $region9: #{decoder_forward.1} parent=0 // pred_fallthru
    _
  // Predicated region
  $region10: #{decoder_forward.1} parent=0 // pred_check
    _
  $region11: #{decoder_forward.1} parent=0 // pred_check_branch
    %21 = sbr.rel (0) target = $region13
  $region12: #{decoder_forward.1} parent=0 // pred_region
    _
  $region13: #{decoder_forward.1} parent=0 // pred_fallthru
    _
  // Predicated region
  $region14: #{decoder_forward.1} parent=0 // pred_check
    _
  $region15: #{decoder_forward.1} parent=0 // pred_check_branch
    %23 = sbr.rel (0) target = $region17
  $region16: #{decoder_forward.1} parent=0 // pred_region
    _
  $region17: #{decoder_forward.1} parent=0 // pred_fallthru
    _
  // Predicated region
  $region18: #{decoder_forward.1} parent=0 // pred_check
    _
  $region19: #{decoder_forward.1} parent=0 // pred_check_branch
    %25 = sbr.rel (0) target = $region21
  $region20: #{decoder_forward.1} parent=0 // pred_region
    _
  $region21: #{decoder_forward.1} parent=0 // pred_fallthru
    _
  // Predicated region
  $region22: #{decoder_forward.1} parent=0 // pred_check
    _
  $region23: #{decoder_forward.1} parent=0 // pred_check_branch
    %27 = sbr.rel (0) target = $region25
  $region24: #{decoder_forward.1} parent=0 // pred_region
    _
  $region25: #{decoder_forward.1} parent=0 // pred_fallthru
    _
  // Predicated region
  $region26: #{decoder_forward.1} parent=0 // pred_check
    _
  $region27: #{decoder_forward.1} parent=0 // pred_check_branch
    %29 = sbr.rel (0) target = $region29
  $region28: #{decoder_forward.1} parent=0 // pred_region
    _
  $region29: #{decoder_forward.1} parent=0 // pred_fallthru
    _
  // Predicated region
  $region30: #{decoder_forward.1} parent=0 // pred_check
    _
  $region31: #{decoder_forward.1} parent=0 // pred_check_branch
    %31 = sbr.rel (0) target = $region33
  $region32: #{decoder_forward.1} parent=0 // pred_region
    _
  $region33: #{decoder_forward.1} parent=0 // pred_fallthru
    _
  // Predicated region
  $region34: #{decoder_forward.1} parent=0 // pred_check
    _
  $region35: #{decoder_forward.1} parent=0 // pred_check_branch
    %33 = sbr.rel (0) target = $region37
  $region36: #{decoder_forward.1} parent=0 // pred_region
    _
  $region37: #{decoder_forward.1} parent=0 // pred_fallthru
    _
  // Predicated region
  $region38: #{decoder_forward.1} parent=0 // pred_check
    _
  $region39: #{decoder_forward.1} parent=0 // pred_check_branch
    %35 = sbr.rel (0) target = $region41
  $region40: #{decoder_forward.1} parent=0 // pred_region
    _
  $region41: #{decoder_forward.1} parent=0 // pred_fallthru
    _
  // Predicated region
  $region42: #{decoder_forward.1} parent=0 // pred_check
    _
  $region43: #{decoder_forward.1} parent=0 // pred_check_branch
    %37 = sbr.rel (0) target = $region45
  $region44: #{decoder_forward.1} parent=0 // pred_region
    _
  $region45: #{decoder_forward.1} parent=0 // pred_fallthru
    _
  %v39 = vld [vmem:[%s0] sm:$0xff]
  %v40 = vld [vmem:[%s0 + $0x8] sm:$0xff]
  %v41 = vld [vmem:[%s0 + $0x10] sm:$0xff]
  %v42 = vld [vmem:[%s0 + $0x18] sm:$0xff]
  %v43 = vld [vmem:[%s0 + $0x20] sm:$0xff]
  %v44 = vld [vmem:[%s0 + $0x28] sm:$0xff]
  %v45 = vld [vmem:[%s0 + $0x30] sm:$0xff]
  %v46 = vld [vmem:[%s0 + $0x38] sm:$0xff]
  %v47 = vld [vmem:[%s0 + $0x40] sm:$0xff]
  %v48 = vld [vmem:[%s0 + $0x48] sm:$0xff]
  %v49 = vld [vmem:[%s0 + $0x50] sm:$0xff]
  %v50 = vld [vmem:[%s0 + $0x58] sm:$0xff]
  %v51 = vld [vmem:[%s0 + $0x60] sm:$0xff]
  %v52 = vld [vmem:[%s0 + $0x68] sm:$0xff]
  %v53 = vld [vmem:[%s0 + $0x70] sm:$0xff]
  %v54 = vld [vmem:[%s0 + $0x78] sm:$0xff]
  %v55 = vpack.c.bf16 %v40, %v39
  %v56 = vpack.c.bf16 %v42, %v41
  %v57 = vpack.c.bf16 %v44, %v43
  %v58 = vpack.c.bf16 %v46, %v45
  %v59 = vpack.c.bf16 %v48, %v47
  %v60 = vpack.c.bf16 %v50, %v49
  %v61 = vpack.c.bf16 %v52, %v51
  %v62 = vpack.c.bf16 %v54, %v53
  %v63 = vld [vmem:[%s1] sm:$0xf]
  %v64 = vld [vmem:[%s2] sm:$0x1]
  %v66 = vlaneseq
  %v67 = vshrl.u32 %v66, 7
  %v68 = vsub.s32 0, %v67
  %v69 = vrot.slane %v64, %v68
  %vm71 = vcmask 64512
  %v73 = vsel %vm71, %v55, 0
  %v76 = vsel %vm71, %v56, 0
  %v79 = vsel %vm71, %v57, 0
  %v82 = vsel %vm71, %v58, 0
  %v85 = vsel %vm71, %v59, 0
  %v88 = vsel %vm71, %v60, 0
  %v91 = vsel %vm71, %v61, 0
  %v94 = vsel %vm71, %v62, 0
  %vm96 = vcmask 1043456
  %v98 = vsel %vm96, %v63, 0
  %100 = vmatprep.subr.bf16.mxu0 0
  %101 = vmatpush1.bf16.msra.mxu0 %v98
  %102 = vmatprep.subr.bf16.mxu0 0
  %103 = vmatpush1.bf16.msra.mxu0 0
  %104 = vmatprep.subr.bf16.mxu0 0
  %105 = vmatpush1.bf16.msra.mxu0 0
  %106 = vmatprep.subr.bf16.mxu0 0
  %107 = vmatpush1.bf16.msra.mxu0 0
  %108 = vmatprep.subr.bf16.mxu0 0
  %109 = vmatpush1.bf16.msra.mxu0 0
  %110 = vmatprep.subr.bf16.mxu0 0
  %111 = vmatpush1.bf16.msra.mxu0 0
  %112 = vmatprep.subr.bf16.mxu0 0
  %113 = vmatpush1.bf16.msra.mxu0 0
  %114 = vmatprep.subr.bf16.mxu0 0
  %115 = vmatpush1.bf16.msra.mxu0 0
  %116 = vmatprep.subr.bf16.mxu0 0
  %117 = vmatpush1.bf16.msra.mxu0 0
  %118 = vmatprep.subr.bf16.mxu0 0
  %119 = vmatpush1.bf16.msra.mxu0 0
  %120 = vmatprep.subr.bf16.mxu0 0
  %121 = vmatpush1.bf16.msra.mxu0 0
  %122 = vmatprep.subr.bf16.mxu0 0
  %123 = vmatpush1.bf16.msra.mxu0 0
  %124 = vmatprep.subr.bf16.mxu0 0
  %125 = vmatpush1.bf16.msra.mxu0 0
  %126 = vmatprep.subr.bf16.mxu0 0
  %127 = vmatpush1.bf16.msra.mxu0 0
  %128 = vmatprep.subr.bf16.mxu0 0
  %129 = vmatpush1.bf16.msra.mxu0 0
  %130 = vmatprep.subr.bf16.mxu0 0
  %131 = vmatpush1.bf16.msra.mxu0 0
  %132 = vmatprep.mubr.bf16.mxu0 0
  %133 = vmatmul.mubr.bf16.gmra.mrb[0].mxu0 %v73
  %v134 = vpop.f32.mrb[0].mxu0
  %v135 = vadd.f32 %v69, %v134
  %v136 = vpop.f32.mrb[0].mxu0
  %v137 = vpop.f32.mrb[0].mxu0
  %v138 = vadd.f32 %v69, %v137
  %v139 = vpop.f32.mrb[0].mxu0
  %140 = vmatprep.mubr.bf16.mxu0 0
  %141 = vmatmul.mubr.bf16.gmra.mrb[0].mxu0 %v76
  %v142 = vpop.f32.mrb[0].mxu0
  %v143 = vadd.f32 %v69, %v142
  %v144 = vpop.f32.mrb[0].mxu0
  %v145 = vpop.f32.mrb[0].mxu0
  %v146 = vadd.f32 %v69, %v145
  %v147 = vpop.f32.mrb[0].mxu0
  %148 = vmatprep.mubr.bf16.mxu0 0
  %149 = vmatmul.mubr.bf16.gmra.mrb[0].mxu0 %v79
  %v150 = vpop.f32.mrb[0].mxu0
  %v151 = vadd.f32 %v69, %v150
  %v152 = vpop.f32.mrb[0].mxu0
  %v153 = vpop.f32.mrb[0].mxu0
  %v154 = vadd.f32 %v69, %v153
  %v155 = vpop.f32.mrb[0].mxu0
  %156 = vmatprep.mubr.bf16.mxu0 0
  %157 = vmatmul.mubr.bf16.gmra.mrb[0].mxu0 %v82
  %v158 = vpop.f32.mrb[0].mxu0
  %v159 = vadd.f32 %v69, %v158
  %v160 = vpop.f32.mrb[0].mxu0
  %v161 = vpop.f32.mrb[0].mxu0
  %v162 = vadd.f32 %v69, %v161
  %v163 = vpop.f32.mrb[0].mxu0
  %164 = vmatprep.mubr.bf16.mxu0 0
  %165 = vmatmul.mubr.bf16.gmra.mrb[0].mxu0 %v85
  %v166 = vpop.f32.mrb[0].mxu0
  %v167 = vadd.f32 %v69, %v166
  %v168 = vpop.f32.mrb[0].mxu0
  %v169 = vpop.f32.mrb[0].mxu0
  %v170 = vadd.f32 %v69, %v169
  %v171 = vpop.f32.mrb[0].mxu0
  %172 = vmatprep.mubr.bf16.mxu0 0
  %173 = vmatmul.mubr.bf16.gmra.mrb[0].mxu0 %v88
  %v174 = vpop.f32.mrb[0].mxu0
  %v175 = vadd.f32 %v69, %v174
  %v176 = vpop.f32.mrb[0].mxu0
  %v177 = vpop.f32.mrb[0].mxu0
  %v178 = vadd.f32 %v69, %v177
  %v179 = vpop.f32.mrb[0].mxu0
  %180 = vmatprep.mubr.bf16.mxu0 0
  %181 = vmatmul.mubr.bf16.gmra.mrb[0].mxu0 %v91
  %v182 = vpop.f32.mrb[0].mxu0
  %v183 = vadd.f32 %v69, %v182
  %v184 = vpop.f32.mrb[0].mxu0
  %v185 = vpop.f32.mrb[0].mxu0
  %v186 = vadd.f32 %v69, %v185
  %v187 = vpop.f32.mrb[0].mxu0
  %188 = vmatprep.mubr.bf16.mxu0 0
  %189 = vmatmul.mubr.bf16.gmra.mrb[0].mxu0 %v94
  %v190 = vpop.f32.mrb[0].mxu0
  %v191 = vadd.f32 %v69, %v190
  %v192 = vpop.f32.mrb[0].mxu0
  %v193 = vpop.f32.mrb[0].mxu0
  %v194 = vadd.f32 %v69, %v193
  %v195 = vpop.f32.mrb[0].mxu0
  %196 = vdwg.mxu0
  %vm197 = vcmp.gt.f32.partialorder %v135, 0.0
  %vm198 = vcmp.gt.f32.partialorder %v138, 0.0
  %vm199 = vcmp.gt.f32.partialorder %v143, 0.0
  %vm200 = vcmp.gt.f32.partialorder %v146, 0.0
  %vm201 = vcmp.gt.f32.partialorder %v151, 0.0
  %vm202 = vcmp.gt.f32.partialorder %v154, 0.0
  %vm203 = vcmp.gt.f32.partialorder %v159, 0.0
  %vm204 = vcmp.gt.f32.partialorder %v162, 0.0
  %vm205 = vcmp.gt.f32.partialorder %v167, 0.0
  %vm206 = vcmp.gt.f32.partialorder %v170, 0.0
  %vm207 = vcmp.gt.f32.partialorder %v175, 0.0
  %vm208 = vcmp.gt.f32.partialorder %v178, 0.0
  %vm209 = vcmp.gt.f32.partialorder %v183, 0.0
  %vm210 = vcmp.gt.f32.partialorder %v186, 0.0
  %vm211 = vcmp.gt.f32.partialorder %v191, 0.0
  %vm212 = vcmp.gt.f32.partialorder %v194, 0.0
  %v213 = vmin.f32 %v135, 0.0
  %v214 = vmin.f32 %v138, 0.0
  %v215 = vmin.f32 %v143, 0.0
  %v216 = vmin.f32 %v146, 0.0
  %v217 = vmin.f32 %v151, 0.0
  %v218 = vmin.f32 %v154, 0.0
  %v219 = vmin.f32 %v159, 0.0
  %v220 = vmin.f32 %v162, 0.0
  %v221 = vmin.f32 %v167, 0.0
  %v222 = vmin.f32 %v170, 0.0
  %v223 = vmin.f32 %v175, 0.0
  %v224 = vmin.f32 %v178, 0.0
  %v225 = vmin.f32 %v183, 0.0
  %v226 = vmin.f32 %v186, 0.0
  %v227 = vmin.f32 %v191, 0.0
  %v228 = vmin.f32 %v194, 0.0
  %v229 = vmul.f32 %v213, 1.442695
  %v230 = vpow.pop %v229
  %v231 = vmul.f32 %v214, 1.442695
  %v232 = vpow.pop %v231
  %v233 = vmul.f32 %v215, 1.442695
  %v234 = vpow.pop %v233
  %v235 = vmul.f32 %v216, 1.442695
  %v236 = vpow.pop %v235
  %v237 = vmul.f32 %v217, 1.442695
  %v238 = vpow.pop %v237
  %v239 = vmul.f32 %v218, 1.442695
  %v240 = vpow.pop %v239
  %v241 = vmul.f32 %v219, 1.442695
  %v242 = vpow.pop %v241
  %v243 = vmul.f32 %v220, 1.442695
  %v244 = vpow.pop %v243
  %v245 = vmul.f32 %v221, 1.442695
  %v246 = vpow.pop %v245
  %v247 = vmul.f32 %v222, 1.442695
  %v248 = vpow.pop %v247
  %v249 = vmul.f32 %v223, 1.442695
  %v250 = vpow.pop %v249
  %v251 = vmul.f32 %v224, 1.442695
  %v252 = vpow.pop %v251
  %v253 = vmul.f32 %v225, 1.442695
  %v254 = vpow.pop %v253
  %v255 = vmul.f32 %v226, 1.442695
  %v256 = vpow.pop %v255
  %v257 = vmul.f32 %v227, 1.442695
  %v258 = vpow.pop %v257
  %v259 = vmul.f32 %v228, 1.442695
  %v260 = vpow.pop %v259
  %v261 = vsub.f32 %v230, 1.0
  %v262 = vsub.f32 %v232, 1.0
  %v263 = vsub.f32 %v234, 1.0
  %v264 = vsub.f32 %v236, 1.0
  %v265 = vsub.f32 %v238, 1.0
  %v266 = vsub.f32 %v240, 1.0
  %v267 = vsub.f32 %v242, 1.0
  %v268 = vsub.f32 %v244, 1.0
  %v269 = vsub.f32 %v246, 1.0
  %v270 = vsub.f32 %v248, 1.0
  %v271 = vsub.f32 %v250, 1.0
  %v272 = vsub.f32 %v252, 1.0
  %v273 = vsub.f32 %v254, 1.0
  %v274 = vsub.f32 %v256, 1.0
  %v275 = vsub.f32 %v258, 1.0
  %v276 = vsub.f32 %v260, 1.0
  %v277 = vsel %vm197, %v135, %v261
  %v278 = vsel %vm198, %v138, %v262
  %v279 = vsel %vm199, %v143, %v263
  %v280 = vsel %vm200, %v146, %v264
  %v281 = vsel %vm201, %v151, %v265
  %v282 = vsel %vm202, %v154, %v266
  %v283 = vsel %vm203, %v159, %v267
  %v284 = vsel %vm204, %v162, %v268
  %v285 = vsel %vm205, %v167, %v269
  %v286 = vsel %vm206, %v170, %v270
  %v287 = vsel %vm207, %v175, %v271
  %v288 = vsel %vm208, %v178, %v272
  %v289 = vsel %vm209, %v183, %v273
  %v290 = vsel %vm210, %v186, %v274
  %v291 = vsel %vm211, %v191, %v275
  %v292 = vsel %vm212, %v194, %v276
  %v293 = vpack.c.bf16 %v278, %v277
  %v294 = vpack.c.bf16 %v280, %v279
  %v295 = vpack.c.bf16 %v282, %v281
  %v296 = vpack.c.bf16 %v284, %v283
  %v297 = vpack.c.bf16 %v286, %v285
  %v298 = vpack.c.bf16 %v288, %v287
  %v299 = vpack.c.bf16 %v290, %v289
  %v300 = vpack.c.bf16 %v292, %v291
  %v301 = vld [vmem:[%s3] sm:$0xf]
  %v302 = vld [vmem:[%s3 + $0x4] sm:$0xf]
  %v303 = vld [vmem:[%s3 + $0x8] sm:$0xf]
  %v304 = vld [vmem:[%s3 + $0xc] sm:$0xf]
  %v305 = vld [vmem:[%s3 + $0x10] sm:$0xf]
  %v306 = vld [vmem:[%s3 + $0x14] sm:$0xf]
  %v307 = vld [vmem:[%s3 + $0x18] sm:$0xf]
  %v308 = vld [vmem:[%s3 + $0x1c] sm:$0xf]
  %v309 = vld [vmem:[%s3 + $0x20] sm:$0xf]
  %v310 = vld [vmem:[%s3 + $0x24] sm:$0xf]
  %v311 = vld [vmem:[%s3 + $0x28] sm:$0xf]
  %v312 = vld [vmem:[%s3 + $0x2c] sm:$0xf]
  %v313 = vld [vmem:[%s3 + $0x30] sm:$0xf]
  %v314 = vld [vmem:[%s3 + $0x34] sm:$0xf]
  %v315 = vld [vmem:[%s3 + $0x38] sm:$0xf]
  %v316 = vld [vmem:[%s3 + $0x3c] sm:$0xf]
  %v317 = vld [vmem:[%s4] sm:$0x1]
  %v319 = vlaneseq
  %v320 = vshrl.u32 %v319, 7
  %v321 = vsub.s32 0, %v320
  %v322 = vrot.slane %v317, %v321
  %v340 = vunpack.c.l.b16 %v301
  %v341 = vunpack.c.l.b16 %v302
  %v342 = vunpack.c.l.b16 %v303
  %v343 = vunpack.c.l.b16 %v304
  %v344 = vunpack.c.l.b16 %v305
  %v345 = vunpack.c.l.b16 %v306
  %v346 = vunpack.c.l.b16 %v307
  %v347 = vunpack.c.l.b16 %v308
  %v348 = vunpack.c.l.b16 %v309
  %v349 = vunpack.c.l.b16 %v310
  %v350 = vunpack.c.l.b16 %v311
  %v351 = vunpack.c.l.b16 %v312
  %v352 = vunpack.c.l.b16 %v313
  %v353 = vunpack.c.l.b16 %v314
  %v354 = vunpack.c.l.b16 %v315
  %v355 = vunpack.c.l.b16 %v316
  %v356 = vpack.c.b16 %v341, %v340
  %v357 = vpack.c.b16 %v343, %v342
  %v358 = vpack.c.b16 %v345, %v344
  %v359 = vpack.c.b16 %v347, %v346
  %v360 = vpack.c.b16 %v349, %v348
  %v361 = vpack.c.b16 %v351, %v350
  %v362 = vpack.c.b16 %v353, %v352
  %v363 = vpack.c.b16 %v355, %v354
  %372 = vmatprep.subr.bf16.mxu0 0
  %373 = vmatpush1.bf16.msra.mxu0 %v356
  %374 = vmatprep.subr.bf16.mxu0 0
  %375 = vmatpush1.bf16.msra.mxu0 %v357
  %376 = vmatprep.subr.bf16.mxu0 0
  %377 = vmatpush1.bf16.msra.mxu0 %v358
  %378 = vmatprep.subr.bf16.mxu0 0
  %379 = vmatpush1.bf16.msra.mxu0 %v359
  %380 = vmatprep.subr.bf16.mxu0 0
  %381 = vmatpush1.bf16.msra.mxu0 %v360
  %382 = vmatprep.subr.bf16.mxu0 0
  %383 = vmatpush1.bf16.msra.mxu0 %v361
  %384 = vmatprep.subr.bf16.mxu0 0
  %385 = vmatpush1.bf16.msra.mxu0 %v362
  %386 = vmatprep.subr.bf16.mxu0 0
  %387 = vmatpush1.bf16.msra.mxu0 %v363
  %388 = vmatprep.subr.bf16.mxu0 0
  %389 = vmatpush1.bf16.msra.mxu0 0
  %390 = vmatprep.subr.bf16.mxu0 0
  %391 = vmatpush1.bf16.msra.mxu0 0
  %392 = vmatprep.subr.bf16.mxu0 0
  %393 = vmatpush1.bf16.msra.mxu0 0
  %394 = vmatprep.subr.bf16.mxu0 0
  %395 = vmatpush1.bf16.msra.mxu0 0
  %396 = vmatprep.subr.bf16.mxu0 0
  %397 = vmatpush1.bf16.msra.mxu0 0
  %398 = vmatprep.subr.bf16.mxu0 0
  %399 = vmatpush1.bf16.msra.mxu0 0
  %400 = vmatprep.subr.bf16.mxu0 0
  %401 = vmatpush1.bf16.msra.mxu0 0
  %402 = vmatprep.subr.bf16.mxu0 0
  %403 = vmatpush1.bf16.msra.mxu0 0
  %404 = vmatprep.mubr.bf16.mxu0 0
  %405 = vmatmul.mubr.bf16.gmra.mrb[0].mxu0 %v293
  %v406 = vpop.f32.mrb[0].mxu0
  %v407 = vadd.f32 %v322, %v406
  %v408 = vpop.f32.mrb[0].mxu0
  %v409 = vpop.f32.mrb[0].mxu0
  %v410 = vadd.f32 %v322, %v409
  %v411 = vpop.f32.mrb[0].mxu0
  %412 = vmatprep.mubr.bf16.mxu0 0
  %413 = vmatmul.mubr.bf16.gmra.mrb[0].mxu0 %v294
  %v414 = vpop.f32.mrb[0].mxu0
  %v415 = vadd.f32 %v322, %v414
  %v416 = vpop.f32.mrb[0].mxu0
  %v417 = vpop.f32.mrb[0].mxu0
  %v418 = vadd.f32 %v322, %v417
  %v419 = vpop.f32.mrb[0].mxu0
  %420 = vmatprep.mubr.bf16.mxu0 0
  %421 = vmatmul.mubr.bf16.gmra.mrb[0].mxu0 %v295
  %v422 = vpop.f32.mrb[0].mxu0
  %v423 = vadd.f32 %v322, %v422
  %v424 = vpop.f32.mrb[0].mxu0
  %v425 = vpop.f32.mrb[0].mxu0
  %v426 = vadd.f32 %v322, %v425
  %v427 = vpop.f32.mrb[0].mxu0
  %428 = vmatprep.mubr.bf16.mxu0 0
  %429 = vmatmul.mubr.bf16.gmra.mrb[0].mxu0 %v296
  %v430 = vpop.f32.mrb[0].mxu0
  %v431 = vadd.f32 %v322, %v430
  %v432 = vpop.f32.mrb[0].mxu0
  %v433 = vpop.f32.mrb[0].mxu0
  %v434 = vadd.f32 %v322, %v433
  %v435 = vpop.f32.mrb[0].mxu0
  %436 = vmatprep.mubr.bf16.mxu0 0
  %437 = vmatmul.mubr.bf16.gmra.mrb[0].mxu0 %v297
  %v438 = vpop.f32.mrb[0].mxu0
  %v439 = vadd.f32 %v322, %v438
  %v440 = vpop.f32.mrb[0].mxu0
  %v441 = vpop.f32.mrb[0].mxu0
  %v442 = vadd.f32 %v322, %v441
  %v443 = vpop.f32.mrb[0].mxu0
  %444 = vmatprep.mubr.bf16.mxu0 0
  %445 = vmatmul.mubr.bf16.gmra.mrb[0].mxu0 %v298
  %v446 = vpop.f32.mrb[0].mxu0
  %v447 = vadd.f32 %v322, %v446
  %v448 = vpop.f32.mrb[0].mxu0
  %v449 = vpop.f32.mrb[0].mxu0
  %v450 = vadd.f32 %v322, %v449
  %v451 = vpop.f32.mrb[0].mxu0
  %452 = vmatprep.mubr.bf16.mxu0 0
  %453 = vmatmul.mubr.bf16.gmra.mrb[0].mxu0 %v299
  %v454 = vpop.f32.mrb[0].mxu0
  %v455 = vadd.f32 %v322, %v454
  %v456 = vpop.f32.mrb[0].mxu0
  %v457 = vpop.f32.mrb[0].mxu0
  %v458 = vadd.f32 %v322, %v457
  %v459 = vpop.f32.mrb[0].mxu0
  %460 = vmatprep.mubr.bf16.mxu0 0
  %461 = vmatmul.mubr.bf16.gmra.mrb[0].mxu0 %v300
  %v462 = vpop.f32.mrb[0].mxu0
  %v463 = vadd.f32 %v322, %v462
  %v464 = vpop.f32.mrb[0].mxu0
  %v465 = vpop.f32.mrb[0].mxu0
  %v466 = vadd.f32 %v322, %v465
  %v467 = vpop.f32.mrb[0].mxu0
  %468 = vdwg.mxu0
  %vm469 = vcmp.gt.f32.partialorder %v407, 0.0
  %vm470 = vcmp.gt.f32.partialorder %v410, 0.0
  %vm471 = vcmp.gt.f32.partialorder %v415, 0.0
  %vm472 = vcmp.gt.f32.partialorder %v418, 0.0
  %vm473 = vcmp.gt.f32.partialorder %v423, 0.0
  %vm474 = vcmp.gt.f32.partialorder %v426, 0.0
  %vm475 = vcmp.gt.f32.partialorder %v431, 0.0
  %vm476 = vcmp.gt.f32.partialorder %v434, 0.0
  %vm477 = vcmp.gt.f32.partialorder %v439, 0.0
  %vm478 = vcmp.gt.f32.partialorder %v442, 0.0
  %vm479 = vcmp.gt.f32.partialorder %v447, 0.0
  %vm480 = vcmp.gt.f32.partialorder %v450, 0.0
  %vm481 = vcmp.gt.f32.partialorder %v455, 0.0
  %vm482 = vcmp.gt.f32.partialorder %v458, 0.0
  %vm483 = vcmp.gt.f32.partialorder %v463, 0.0
  %vm484 = vcmp.gt.f32.partialorder %v466, 0.0
  %v485 = vmin.f32 %v407, 0.0
  %v486 = vmin.f32 %v410, 0.0
  %v487 = vmin.f32 %v415, 0.0
  %v488 = vmin.f32 %v418, 0.0
  %v489 = vmin.f32 %v423, 0.0
  %v490 = vmin.f32 %v426, 0.0
  %v491 = vmin.f32 %v431, 0.0
  %v492 = vmin.f32 %v434, 0.0
  %v493 = vmin.f32 %v439, 0.0
  %v494 = vmin.f32 %v442, 0.0
  %v495 = vmin.f32 %v447, 0.0
  %v496 = vmin.f32 %v450, 0.0
  %v497 = vmin.f32 %v455, 0.0
  %v498 = vmin.f32 %v458, 0.0
  %v499 = vmin.f32 %v463, 0.0
  %v500 = vmin.f32 %v466, 0.0
  %v501 = vmul.f32 %v485, 1.442695
  %v502 = vpow.pop %v501
  %v503 = vmul.f32 %v486, 1.442695
  %v504 = vpow.pop %v503
  %v505 = vmul.f32 %v487, 1.442695
  %v506 = vpow.pop %v505
  %v507 = vmul.f32 %v488, 1.442695
  %v508 = vpow.pop %v507
  %v509 = vmul.f32 %v489, 1.442695
  %v510 = vpow.pop %v509
  %v511 = vmul.f32 %v490, 1.442695
  %v512 = vpow.pop %v511
  %v513 = vmul.f32 %v491, 1.442695
  %v514 = vpow.pop %v513
  %v515 = vmul.f32 %v492, 1.442695
  %v516 = vpow.pop %v515
  %v517 = vmul.f32 %v493, 1.442695
  %v518 = vpow.pop %v517
  %v519 = vmul.f32 %v494, 1.442695
  %v520 = vpow.pop %v519
  %v521 = vmul.f32 %v495, 1.442695
  %v522 = vpow.pop %v521
  %v523 = vmul.f32 %v496, 1.442695
  %v524 = vpow.pop %v523
  %v525 = vmul.f32 %v497, 1.442695
  %v526 = vpow.pop %v525
  %v527 = vmul.f32 %v498, 1.442695
  %v528 = vpow.pop %v527
  %v529 = vmul.f32 %v499, 1.442695
  %v530 = vpow.pop %v529
  %v531 = vmul.f32 %v500, 1.442695
  %v532 = vpow.pop %v531
  %v533 = vsub.f32 %v502, 1.0
  %v534 = vsub.f32 %v504, 1.0
  %v535 = vsub.f32 %v506, 1.0
  %v536 = vsub.f32 %v508, 1.0
  %v537 = vsub.f32 %v510, 1.0
  %v538 = vsub.f32 %v512, 1.0
  %v539 = vsub.f32 %v514, 1.0
  %v540 = vsub.f32 %v516, 1.0
  %v541 = vsub.f32 %v518, 1.0
  %v542 = vsub.f32 %v520, 1.0
  %v543 = vsub.f32 %v522, 1.0
  %v544 = vsub.f32 %v524, 1.0
  %v545 = vsub.f32 %v526, 1.0
  %v546 = vsub.f32 %v528, 1.0
  %v547 = vsub.f32 %v530, 1.0
  %v548 = vsub.f32 %v532, 1.0
  %v549 = vsel %vm469, %v407, %v533
  %v550 = vsel %vm470, %v410, %v534
  %v551 = vsel %vm471, %v415, %v535
  %v552 = vsel %vm472, %v418, %v536
  %v553 = vsel %vm473, %v423, %v537
  %v554 = vsel %vm474, %v426, %v538
  %v555 = vsel %vm475, %v431, %v539
  %v556 = vsel %vm476, %v434, %v540
  %v557 = vsel %vm477, %v439, %v541
  %v558 = vsel %vm478, %v442, %v542
  %v559 = vsel %vm479, %v447, %v543
  %v560 = vsel %vm480, %v450, %v544
  %v561 = vsel %vm481, %v455, %v545
  %v562 = vsel %vm482, %v458, %v546
  %v563 = vsel %vm483, %v463, %v547
  %v564 = vsel %vm484, %v466, %v548
  %v565 = vpack.c.bf16 %v550, %v549
  %v566 = vpack.c.bf16 %v552, %v551
  %v567 = vpack.c.bf16 %v554, %v553
  %v568 = vpack.c.bf16 %v556, %v555
  %v569 = vpack.c.bf16 %v558, %v557
  %v570 = vpack.c.bf16 %v560, %v559
  %v571 = vpack.c.bf16 %v562, %v561
  %v572 = vpack.c.bf16 %v564, %v563
  %v573 = vld [vmem:[%s5] sm:$0xf]
  %v574 = vld [vmem:[%s5 + $0x4] sm:$0xf]
  %v575 = vld [vmem:[%s5 + $0x8] sm:$0xf]
  %v576 = vld [vmem:[%s5 + $0xc] sm:$0xf]
  %v577 = vld [vmem:[%s5 + $0x10] sm:$0xf]
  %v578 = vld [vmem:[%s5 + $0x14] sm:$0xf]
  %v579 = vld [vmem:[%s5 + $0x18] sm:$0xf]
  %v580 = vld [vmem:[%s5 + $0x1c] sm:$0xf]
  %v581 = vld [vmem:[%s5 + $0x20] sm:$0xf]
  %v582 = vld [vmem:[%s5 + $0x24] sm:$0xf]
  %v583 = vld [vmem:[%s5 + $0x28] sm:$0xf]
  %v584 = vld [vmem:[%s5 + $0x2c] sm:$0xf]
  %v585 = vld [vmem:[%s5 + $0x30] sm:$0xf]
  %v586 = vld [vmem:[%s5 + $0x34] sm:$0xf]
  %v587 = vld [vmem:[%s5 + $0x38] sm:$0xf]
  %v588 = vld [vmem:[%s5 + $0x3c] sm:$0xf]
  %v589 = vld [vmem:[%s6] sm:$0x1]
  %v591 = vlaneseq
  %v592 = vshrl.u32 %v591, 7
  %v593 = vsub.s32 0, %v592
  %v594 = vrot.slane %v589, %v593
  %v612 = vunpack.c.l.b16 %v573
  %v613 = vunpack.c.l.b16 %v574
  %v614 = vunpack.c.l.b16 %v575
  %v615 = vunpack.c.l.b16 %v576
  %v616 = vunpack.c.l.b16 %v577
  %v617 = vunpack.c.l.b16 %v578
  %v618 = vunpack.c.l.b16 %v579
  %v619 = vunpack.c.l.b16 %v580
  %v620 = vunpack.c.l.b16 %v581
  %v621 = vunpack.c.l.b16 %v582
  %v622 = vunpack.c.l.b16 %v583
  %v623 = vunpack.c.l.b16 %v584
  %v624 = vunpack.c.l.b16 %v585
  %v625 = vunpack.c.l.b16 %v586
  %v626 = vunpack.c.l.b16 %v587
  %v627 = vunpack.c.l.b16 %v588
  %v628 = vpack.c.b16 %v613, %v612
  %v629 = vpack.c.b16 %v615, %v614
  %v630 = vpack.c.b16 %v617, %v616
  %v631 = vpack.c.b16 %v619, %v618
  %v632 = vpack.c.b16 %v621, %v620
  %v633 = vpack.c.b16 %v623, %v622
  %v634 = vpack.c.b16 %v625, %v624
  %v635 = vpack.c.b16 %v627, %v626
  %644 = vmatprep.subr.bf16.mxu0 0
  %645 = vmatpush1.bf16.msra.mxu0 %v628
  %646 = vmatprep.subr.bf16.mxu0 0
  %647 = vmatpush1.bf16.msra.mxu0 %v629
  %648 = vmatprep.subr.bf16.mxu0 0
  %649 = vmatpush1.bf16.msra.mxu0 %v630
  %650 = vmatprep.subr.bf16.mxu0 0
  %651 = vmatpush1.bf16.msra.mxu0 %v631
  %652 = vmatprep.subr.bf16.mxu0 0
  %653 = vmatpush1.bf16.msra.mxu0 %v632
  %654 = vmatprep.subr.bf16.mxu0 0
  %655 = vmatpush1.bf16.msra.mxu0 %v633
  %656 = vmatprep.subr.bf16.mxu0 0
  %657 = vmatpush1.bf16.msra.mxu0 %v634
  %658 = vmatprep.subr.bf16.mxu0 0
  %659 = vmatpush1.bf16.msra.mxu0 %v635
  %660 = vmatprep.subr.bf16.mxu0 0
  %661 = vmatpush1.bf16.msra.mxu0 0
  %662 = vmatprep.subr.bf16.mxu0 0
  %663 = vmatpush1.bf16.msra.mxu0 0
  %664 = vmatprep.subr.bf16.mxu0 0
  %665 = vmatpush1.bf16.msra.mxu0 0
  %666 = vmatprep.subr.bf16.mxu0 0
  %667 = vmatpush1.bf16.msra.mxu0 0
  %668 = vmatprep.subr.bf16.mxu0 0
  %669 = vmatpush1.bf16.msra.mxu0 0
  %670 = vmatprep.subr.bf16.mxu0 0
  %671 = vmatpush1.bf16.msra.mxu0 0
  %672 = vmatprep.subr.bf16.mxu0 0
  %673 = vmatpush1.bf16.msra.mxu0 0
  %674 = vmatprep.subr.bf16.mxu0 0
  %675 = vmatpush1.bf16.msra.mxu0 0
  %676 = vmatprep.mubr.bf16.mxu0 0
  %677 = vmatmul.mubr.bf16.gmra.mrb[0].mxu0 %v565
  %v678 = vpop.f32.mrb[0].mxu0
  %v679 = vadd.f32 %v594, %v678
  %v680 = vpop.f32.mrb[0].mxu0
  %v681 = vpop.f32.mrb[0].mxu0
  %v682 = vadd.f32 %v594, %v681
  %v683 = vpop.f32.mrb[0].mxu0
  %684 = vmatprep.mubr.bf16.mxu0 0
  %685 = vmatmul.mubr.bf16.gmra.mrb[0].mxu0 %v566
  %v686 = vpop.f32.mrb[0].mxu0
  %v687 = vadd.f32 %v594, %v686
  %v688 = vpop.f32.mrb[0].mxu0
  %v689 = vpop.f32.mrb[0].mxu0
  %v690 = vadd.f32 %v594, %v689
  %v691 = vpop.f32.mrb[0].mxu0
  %692 = vmatprep.mubr.bf16.mxu0 0
  %693 = vmatmul.mubr.bf16.gmra.mrb[0].mxu0 %v567
  %v694 = vpop.f32.mrb[0].mxu0
  %v695 = vadd.f32 %v594, %v694
  %v696 = vpop.f32.mrb[0].mxu0
  %v697 = vpop.f32.mrb[0].mxu0
  %v698 = vadd.f32 %v594, %v697
  %v699 = vpop.f32.mrb[0].mxu0
  %700 = vmatprep.mubr.bf16.mxu0 0
  %701 = vmatmul.mubr.bf16.gmra.mrb[0].mxu0 %v568
  %v702 = vpop.f32.mrb[0].mxu0
  %v703 = vadd.f32 %v594, %v702
  %v704 = vpop.f32.mrb[0].mxu0
  %v705 = vpop.f32.mrb[0].mxu0
  %v706 = vadd.f32 %v594, %v705
  %v707 = vpop.f32.mrb[0].mxu0
  %708 = vmatprep.mubr.bf16.mxu0 0
  %709 = vmatmul.mubr.bf16.gmra.mrb[0].mxu0 %v569
  %v710 = vpop.f32.mrb[0].mxu0
  %v711 = vadd.f32 %v594, %v710
  %v712 = vpop.f32.mrb[0].mxu0
  %v713 = vpop.f32.mrb[0].mxu0
  %v714 = vadd.f32 %v594, %v713
  %v715 = vpop.f32.mrb[0].mxu0
  %716 = vmatprep.mubr.bf16.mxu0 0
  %717 = vmatmul.mubr.bf16.gmra.mrb[0].mxu0 %v570
  %v718 = vpop.f32.mrb[0].mxu0
  %v719 = vadd.f32 %v594, %v718
  %v720 = vpop.f32.mrb[0].mxu0
  %v721 = vpop.f32.mrb[0].mxu0
  %v722 = vadd.f32 %v594, %v721
  %v723 = vpop.f32.mrb[0].mxu0
  %724 = vmatprep.mubr.bf16.mxu0 0
  %725 = vmatmul.mubr.bf16.gmra.mrb[0].mxu0 %v571
  %v726 = vpop.f32.mrb[0].mxu0
  %v727 = vadd.f32 %v594, %v726
  %v728 = vpop.f32.mrb[0].mxu0
  %v729 = vpop.f32.mrb[0].mxu0
  %v730 = vadd.f32 %v594, %v729
  %v731 = vpop.f32.mrb[0].mxu0
  %732 = vmatprep.mubr.bf16.mxu0 0
  %733 = vmatmul.mubr.bf16.gmra.mrb[0].mxu0 %v572
  %v734 = vpop.f32.mrb[0].mxu0
  %v735 = vadd.f32 %v594, %v734
  %v736 = vpop.f32.mrb[0].mxu0
  %v737 = vpop.f32.mrb[0].mxu0
  %v738 = vadd.f32 %v594, %v737
  %v739 = vpop.f32.mrb[0].mxu0
  %740 = vdwg.mxu0
  %vm741 = vcmp.gt.f32.partialorder %v679, 0.0
  %vm742 = vcmp.gt.f32.partialorder %v682, 0.0
  %vm743 = vcmp.gt.f32.partialorder %v687, 0.0
  %vm744 = vcmp.gt.f32.partialorder %v690, 0.0
  %vm745 = vcmp.gt.f32.partialorder %v695, 0.0
  %vm746 = vcmp.gt.f32.partialorder %v698, 0.0
  %vm747 = vcmp.gt.f32.partialorder %v703, 0.0
  %vm748 = vcmp.gt.f32.partialorder %v706, 0.0
  %vm749 = vcmp.gt.f32.partialorder %v711, 0.0
  %vm750 = vcmp.gt.f32.partialorder %v714, 0.0
  %vm751 = vcmp.gt.f32.partialorder %v719, 0.0
  %vm752 = vcmp.gt.f32.partialorder %v722, 0.0
  %vm753 = vcmp.gt.f32.partialorder %v727, 0.0
  %vm754 = vcmp.gt.f32.partialorder %v730, 0.0
  %vm755 = vcmp.gt.f32.partialorder %v735, 0.0
  %vm756 = vcmp.gt.f32.partialorder %v738, 0.0
  %v757 = vmin.f32 %v679, 0.0
  %v758 = vmin.f32 %v682, 0.0
  %v759 = vmin.f32 %v687, 0.0
  %v760 = vmin.f32 %v690, 0.0
  %v761 = vmin.f32 %v695, 0.0
  %v762 = vmin.f32 %v698, 0.0
  %v763 = vmin.f32 %v703, 0.0
  %v764 = vmin.f32 %v706, 0.0
  %v765 = vmin.f32 %v711, 0.0
  %v766 = vmin.f32 %v714, 0.0
  %v767 = vmin.f32 %v719, 0.0
  %v768 = vmin.f32 %v722, 0.0
  %v769 = vmin.f32 %v727, 0.0
  %v770 = vmin.f32 %v730, 0.0
  %v771 = vmin.f32 %v735, 0.0
  %v772 = vmin.f32 %v738, 0.0
  %v773 = vmul.f32 %v757, 1.442695
  %v774 = vpow.pop %v773
  %v775 = vmul.f32 %v758, 1.442695
  %v776 = vpow.pop %v775
  %v777 = vmul.f32 %v759, 1.442695
  %v778 = vpow.pop %v777
  %v779 = vmul.f32 %v760, 1.442695
  %v780 = vpow.pop %v779
  %v781 = vmul.f32 %v761, 1.442695
  %v782 = vpow.pop %v781
  %v783 = vmul.f32 %v762, 1.442695
  %v784 = vpow.pop %v783
  %v785 = vmul.f32 %v763, 1.442695
  %v786 = vpow.pop %v785
  %v787 = vmul.f32 %v764, 1.442695
  %v788 = vpow.pop %v787
  %v789 = vmul.f32 %v765, 1.442695
  %v790 = vpow.pop %v789
  %v791 = vmul.f32 %v766, 1.442695
  %v792 = vpow.pop %v791
  %v793 = vmul.f32 %v767, 1.442695
  %v794 = vpow.pop %v793
  %v795 = vmul.f32 %v768, 1.442695
  %v796 = vpow.pop %v795
  %v797 = vmul.f32 %v769, 1.442695
  %v798 = vpow.pop %v797
  %v799 = vmul.f32 %v770, 1.442695
  %v800 = vpow.pop %v799
  %v801 = vmul.f32 %v771, 1.442695
  %v802 = vpow.pop %v801
  %v803 = vmul.f32 %v772, 1.442695
  %v804 = vpow.pop %v803
  %v805 = vsub.f32 %v774, 1.0
  %v806 = vsub.f32 %v776, 1.0
  %v807 = vsub.f32 %v778, 1.0
  %v808 = vsub.f32 %v780, 1.0
  %v809 = vsub.f32 %v782, 1.0
  %v810 = vsub.f32 %v784, 1.0
  %v811 = vsub.f32 %v786, 1.0
  %v812 = vsub.f32 %v788, 1.0
  %v813 = vsub.f32 %v790, 1.0
  %v814 = vsub.f32 %v792, 1.0
  %v815 = vsub.f32 %v794, 1.0
  %v816 = vsub.f32 %v796, 1.0
  %v817 = vsub.f32 %v798, 1.0
  %v818 = vsub.f32 %v800, 1.0
  %v819 = vsub.f32 %v802, 1.0
  %v820 = vsub.f32 %v804, 1.0
  %v821 = vsel %vm741, %v679, %v805
  %v822 = vsel %vm742, %v682, %v806
  %v823 = vsel %vm743, %v687, %v807
  %v824 = vsel %vm744, %v690, %v808
  %v825 = vsel %vm745, %v695, %v809
  %v826 = vsel %vm746, %v698, %v810
  %v827 = vsel %vm747, %v703, %v811
  %v828 = vsel %vm748, %v706, %v812
  %v829 = vsel %vm749, %v711, %v813
  %v830 = vsel %vm750, %v714, %v814
  %v831 = vsel %vm751, %v719, %v815
  %v832 = vsel %vm752, %v722, %v816
  %v833 = vsel %vm753, %v727, %v817
  %v834 = vsel %vm754, %v730, %v818
  %v835 = vsel %vm755, %v735, %v819
  %v836 = vsel %vm756, %v738, %v820
  %v837 = vpack.c.bf16 %v822, %v821
  %v838 = vpack.c.bf16 %v824, %v823
  %v839 = vpack.c.bf16 %v826, %v825
  %v840 = vpack.c.bf16 %v828, %v827
  %v841 = vpack.c.bf16 %v830, %v829
  %v842 = vpack.c.bf16 %v832, %v831
  %v843 = vpack.c.bf16 %v834, %v833
  %v844 = vpack.c.bf16 %v836, %v835
  %v845 = vld [vmem:[%s7] sm:$0xf]
  %v846 = vld [vmem:[%s7 + $0x4] sm:$0xf]
  %v847 = vld [vmem:[%s7 + $0x8] sm:$0xf]
  %v848 = vld [vmem:[%s7 + $0xc] sm:$0xf]
  %v849 = vld [vmem:[%s7 + $0x10] sm:$0xf]
  %v850 = vld [vmem:[%s7 + $0x14] sm:$0xf]
  %v851 = vld [vmem:[%s7 + $0x18] sm:$0xf]
  %v852 = vld [vmem:[%s7 + $0x1c] sm:$0xf]
  %v853 = vld [vmem:[%s7 + $0x20] sm:$0xf]
  %v854 = vld [vmem:[%s7 + $0x24] sm:$0xf]
  %v855 = vld [vmem:[%s7 + $0x28] sm:$0xf]
  %v856 = vld [vmem:[%s7 + $0x2c] sm:$0xf]
  %v857 = vld [vmem:[%s7 + $0x30] sm:$0xf]
  %v858 = vld [vmem:[%s7 + $0x34] sm:$0xf]
  %v859 = vld [vmem:[%s7 + $0x38] sm:$0xf]
  %v860 = vld [vmem:[%s7 + $0x3c] sm:$0xf]
  %v861 = vld [vmem:[%s8] sm:$0x1]
  %v863 = vlaneseq
  %v864 = vshrl.u32 %v863, 7
  %v865 = vsub.s32 0, %v864
  %v866 = vrot.slane %v861, %v865
  %v884 = vunpack.c.l.b16 %v845
  %v885 = vunpack.c.l.b16 %v846
  %v886 = vunpack.c.l.b16 %v847
  %v887 = vunpack.c.l.b16 %v848
  %v888 = vunpack.c.l.b16 %v849
  %v889 = vunpack.c.l.b16 %v850
  %v890 = vunpack.c.l.b16 %v851
  %v891 = vunpack.c.l.b16 %v852
  %v892 = vunpack.c.l.b16 %v853
  %v893 = vunpack.c.l.b16 %v854
  %v894 = vunpack.c.l.b16 %v855
  %v895 = vunpack.c.l.b16 %v856
  %v896 = vunpack.c.l.b16 %v857
  %v897 = vunpack.c.l.b16 %v858
  %v898 = vunpack.c.l.b16 %v859
  %v899 = vunpack.c.l.b16 %v860
  %v900 = vpack.c.b16 %v885, %v884
  %v901 = vpack.c.b16 %v887, %v886
  %v902 = vpack.c.b16 %v889, %v888
  %v903 = vpack.c.b16 %v891, %v890
  %v904 = vpack.c.b16 %v893, %v892
  %v905 = vpack.c.b16 %v895, %v894
  %v906 = vpack.c.b16 %v897, %v896
  %v907 = vpack.c.b16 %v899, %v898
  %916 = vmatprep.subr.bf16.mxu0 0
  %917 = vmatpush1.bf16.msra.mxu0 %v900
  %918 = vmatprep.subr.bf16.mxu0 0
  %919 = vmatpush1.bf16.msra.mxu0 %v901
  %920 = vmatprep.subr.bf16.mxu0 0
  %921 = vmatpush1.bf16.msra.mxu0 %v902
  %922 = vmatprep.subr.bf16.mxu0 0
  %923 = vmatpush1.bf16.msra.mxu0 %v903
  %924 = vmatprep.subr.bf16.mxu0 0
  %925 = vmatpush1.bf16.msra.mxu0 %v904
  %926 = vmatprep.subr.bf16.mxu0 0
  %927 = vmatpush1.bf16.msra.mxu0 %v905
  %928 = vmatprep.subr.bf16.mxu0 0
  %929 = vmatpush1.bf16.msra.mxu0 %v906
  %930 = vmatprep.subr.bf16.mxu0 0
  %931 = vmatpush1.bf16.msra.mxu0 %v907
  %932 = vmatprep.subr.bf16.mxu0 0
  %933 = vmatpush1.bf16.msra.mxu0 0
  %934 = vmatprep.subr.bf16.mxu0 0
  %935 = vmatpush1.bf16.msra.mxu0 0
  %936 = vmatprep.subr.bf16.mxu0 0
  %937 = vmatpush1.bf16.msra.mxu0 0
  %938 = vmatprep.subr.bf16.mxu0 0
  %939 = vmatpush1.bf16.msra.mxu0 0
  %940 = vmatprep.subr.bf16.mxu0 0
  %941 = vmatpush1.bf16.msra.mxu0 0
  %942 = vmatprep.subr.bf16.mxu0 0
  %943 = vmatpush1.bf16.msra.mxu0 0
  %944 = vmatprep.subr.bf16.mxu0 0
  %945 = vmatpush1.bf16.msra.mxu0 0
  %946 = vmatprep.subr.bf16.mxu0 0
  %947 = vmatpush1.bf16.msra.mxu0 0
  %948 = vmatprep.mubr.bf16.mxu0 0
  %949 = vmatmul.mubr.bf16.gmra.mrb[0].mxu0 %v837
  %v950 = vpop.f32.mrb[0].mxu0
  %v951 = vadd.f32 %v866, %v950
  %v952 = vpop.f32.mrb[0].mxu0
  %v953 = vpop.f32.mrb[0].mxu0
  %v954 = vadd.f32 %v866, %v953
  %v955 = vpop.f32.mrb[0].mxu0
  %956 = vmatprep.mubr.bf16.mxu0 0
  %957 = vmatmul.mubr.bf16.gmra.mrb[0].mxu0 %v838
  %v958 = vpop.f32.mrb[0].mxu0
  %v959 = vadd.f32 %v866, %v958
  %v960 = vpop.f32.mrb[0].mxu0
  %v961 = vpop.f32.mrb[0].mxu0
  %v962 = vadd.f32 %v866, %v961
  %v963 = vpop.f32.mrb[0].mxu0
  %964 = vmatprep.mubr.bf16.mxu0 0
  %965 = vmatmul.mubr.bf16.gmra.mrb[0].mxu0 %v839
  %v966 = vpop.f32.mrb[0].mxu0
  %v967 = vadd.f32 %v866, %v966
  %v968 = vpop.f32.mrb[0].mxu0
  %v969 = vpop.f32.mrb[0].mxu0
  %v970 = vadd.f32 %v866, %v969
  %v971 = vpop.f32.mrb[0].mxu0
  %972 = vmatprep.mubr.bf16.mxu0 0
  %973 = vmatmul.mubr.bf16.gmra.mrb[0].mxu0 %v840
  %v974 = vpop.f32.mrb[0].mxu0
  %v975 = vadd.f32 %v866, %v974
  %v976 = vpop.f32.mrb[0].mxu0
  %v977 = vpop.f32.mrb[0].mxu0
  %v978 = vadd.f32 %v866, %v977
  %v979 = vpop.f32.mrb[0].mxu0
  %980 = vmatprep.mubr.bf16.mxu0 0
  %981 = vmatmul.mubr.bf16.gmra.mrb[0].mxu0 %v841
  %v982 = vpop.f32.mrb[0].mxu0
  %v983 = vadd.f32 %v866, %v982
  %v984 = vpop.f32.mrb[0].mxu0
  %v985 = vpop.f32.mrb[0].mxu0
  %v986 = vadd.f32 %v866, %v985
  %v987 = vpop.f32.mrb[0].mxu0
  %988 = vmatprep.mubr.bf16.mxu0 0
  %989 = vmatmul.mubr.bf16.gmra.mrb[0].mxu0 %v842
  %v990 = vpop.f32.mrb[0].mxu0
  %v991 = vadd.f32 %v866, %v990
  %v992 = vpop.f32.mrb[0].mxu0
  %v993 = vpop.f32.mrb[0].mxu0
  %v994 = vadd.f32 %v866, %v993
  %v995 = vpop.f32.mrb[0].mxu0
  %996 = vmatprep.mubr.bf16.mxu0 0
  %997 = vmatmul.mubr.bf16.gmra.mrb[0].mxu0 %v843
  %v998 = vpop.f32.mrb[0].mxu0
  %v999 = vadd.f32 %v866, %v998
  %v1000 = vpop.f32.mrb[0].mxu0
  %v1001 = vpop.f32.mrb[0].mxu0
  %v1002 = vadd.f32 %v866, %v1001
  %v1003 = vpop.f32.mrb[0].mxu0
  %1004 = vmatprep.mubr.bf16.mxu0 0
  %1005 = vmatmul.mubr.bf16.gmra.mrb[0].mxu0 %v844
  %v1006 = vpop.f32.mrb[0].mxu0
  %v1007 = vadd.f32 %v866, %v1006
  %v1008 = vpop.f32.mrb[0].mxu0
  %v1009 = vpop.f32.mrb[0].mxu0
  %v1010 = vadd.f32 %v866, %v1009
  %v1011 = vpop.f32.mrb[0].mxu0
  %1012 = vdwg.mxu0
  %vm1013 = vcmp.gt.f32.partialorder %v951, 0.0
  %vm1014 = vcmp.gt.f32.partialorder %v954, 0.0
  %vm1015 = vcmp.gt.f32.partialorder %v959, 0.0
  %vm1016 = vcmp.gt.f32.partialorder %v962, 0.0
  %vm1017 = vcmp.gt.f32.partialorder %v967, 0.0
  %vm1018 = vcmp.gt.f32.partialorder %v970, 0.0
  %vm1019 = vcmp.gt.f32.partialorder %v975, 0.0
  %vm1020 = vcmp.gt.f32.partialorder %v978, 0.0
  %vm1021 = vcmp.gt.f32.partialorder %v983, 0.0
  %vm1022 = vcmp.gt.f32.partialorder %v986, 0.0
  %vm1023 = vcmp.gt.f32.partialorder %v991, 0.0
  %vm1024 = vcmp.gt.f32.partialorder %v994, 0.0
  %vm1025 = vcmp.gt.f32.partialorder %v999, 0.0
  %vm1026 = vcmp.gt.f32.partialorder %v1002, 0.0
  %vm1027 = vcmp.gt.f32.partialorder %v1007, 0.0
  %vm1028 = vcmp.gt.f32.partialorder %v1010, 0.0
  %v1029 = vmin.f32 %v951, 0.0
  %v1030 = vmin.f32 %v954, 0.0
  %v1031 = vmin.f32 %v959, 0.0
  %v1032 = vmin.f32 %v962, 0.0
  %v1033 = vmin.f32 %v967, 0.0
  %v1034 = vmin.f32 %v970, 0.0
  %v1035 = vmin.f32 %v975, 0.0
  %v1036 = vmin.f32 %v978, 0.0
  %v1037 = vmin.f32 %v983, 0.0
  %v1038 = vmin.f32 %v986, 0.0
  %v1039 = vmin.f32 %v991, 0.0
  %v1040 = vmin.f32 %v994, 0.0
  %v1041 = vmin.f32 %v999, 0.0
  %v1042 = vmin.f32 %v1002, 0.0
  %v1043 = vmin.f32 %v1007, 0.0
  %v1044 = vmin.f32 %v1010, 0.0
  %v1045 = vmul.f32 %v1029, 1.442695
  %v1046 = vpow.pop %v1045
  %v1047 = vmul.f32 %v1030, 1.442695
  %v1048 = vpow.pop %v1047
  %v1049 = vmul.f32 %v1031, 1.442695
  %v1050 = vpow.pop %v1049
  %v1051 = vmul.f32 %v1032, 1.442695
  %v1052 = vpow.pop %v1051
  %v1053 = vmul.f32 %v1033, 1.442695
  %v1054 = vpow.pop %v1053
  %v1055 = vmul.f32 %v1034, 1.442695
  %v1056 = vpow.pop %v1055
  %v1057 = vmul.f32 %v1035, 1.442695
  %v1058 = vpow.pop %v1057
  %v1059 = vmul.f32 %v1036, 1.442695
  %v1060 = vpow.pop %v1059
  %v1061 = vmul.f32 %v1037, 1.442695
  %v1062 = vpow.pop %v1061
  %v1063 = vmul.f32 %v1038, 1.442695
  %v1064 = vpow.pop %v1063
  %v1065 = vmul.f32 %v1039, 1.442695
  %v1066 = vpow.pop %v1065
  %v1067 = vmul.f32 %v1040, 1.442695
  %v1068 = vpow.pop %v1067
  %v1069 = vmul.f32 %v1041, 1.442695
  %v1070 = vpow.pop %v1069
  %v1071 = vmul.f32 %v1042, 1.442695
  %v1072 = vpow.pop %v1071
  %v1073 = vmul.f32 %v1043, 1.442695
  %v1074 = vpow.pop %v1073
  %v1075 = vmul.f32 %v1044, 1.442695
  %v1076 = vpow.pop %v1075
  %v1077 = vsub.f32 %v1046, 1.0
  %v1078 = vsub.f32 %v1048, 1.0
  %v1079 = vsub.f32 %v1050, 1.0
  %v1080 = vsub.f32 %v1052, 1.0
  %v1081 = vsub.f32 %v1054, 1.0
  %v1082 = vsub.f32 %v1056, 1.0
  %v1083 = vsub.f32 %v1058, 1.0
  %v1084 = vsub.f32 %v1060, 1.0
  %v1085 = vsub.f32 %v1062, 1.0
  %v1086 = vsub.f32 %v1064, 1.0
  %v1087 = vsub.f32 %v1066, 1.0
  %v1088 = vsub.f32 %v1068, 1.0
  %v1089 = vsub.f32 %v1070, 1.0
  %v1090 = vsub.f32 %v1072, 1.0
  %v1091 = vsub.f32 %v1074, 1.0
  %v1092 = vsub.f32 %v1076, 1.0
  %v1093 = vsel %vm1013, %v951, %v1077
  %v1094 = vsel %vm1014, %v954, %v1078
  %v1095 = vsel %vm1015, %v959, %v1079
  %v1096 = vsel %vm1016, %v962, %v1080
  %v1097 = vsel %vm1017, %v967, %v1081
  %v1098 = vsel %vm1018, %v970, %v1082
  %v1099 = vsel %vm1019, %v975, %v1083
  %v1100 = vsel %vm1020, %v978, %v1084
  %v1101 = vsel %vm1021, %v983, %v1085
  %v1102 = vsel %vm1022, %v986, %v1086
  %v1103 = vsel %vm1023, %v991, %v1087
  %v1104 = vsel %vm1024, %v994, %v1088
  %v1105 = vsel %vm1025, %v999, %v1089
  %v1106 = vsel %vm1026, %v1002, %v1090
  %v1107 = vsel %vm1027, %v1007, %v1091
  %v1108 = vsel %vm1028, %v1010, %v1092
  %v1109 = vpack.c.bf16 %v1094, %v1093
  %v1110 = vpack.c.bf16 %v1096, %v1095
  %v1111 = vpack.c.bf16 %v1098, %v1097
  %v1112 = vpack.c.bf16 %v1100, %v1099
  %v1113 = vpack.c.bf16 %v1102, %v1101
  %v1114 = vpack.c.bf16 %v1104, %v1103
  %v1115 = vpack.c.bf16 %v1106, %v1105
  %v1116 = vpack.c.bf16 %v1108, %v1107
  %v1117 = vld [vmem:[%s9] sm:$0xf]
  %v1118 = vld [vmem:[%s9 + $0x4] sm:$0xf]
  %v1119 = vld [vmem:[%s9 + $0x8] sm:$0xf]
  %v1120 = vld [vmem:[%s9 + $0xc] sm:$0xf]
  %v1121 = vld [vmem:[%s9 + $0x10] sm:$0xf]
  %v1122 = vld [vmem:[%s9 + $0x14] sm:$0xf]
  %v1123 = vld [vmem:[%s9 + $0x18] sm:$0xf]
  %v1124 = vld [vmem:[%s9 + $0x1c] sm:$0xf]
  %v1125 = vld [vmem:[%s9 + $0x20] sm:$0xf]
  %v1126 = vld [vmem:[%s9 + $0x24] sm:$0xf]
  %v1127 = vld [vmem:[%s9 + $0x28] sm:$0xf]
  %v1128 = vld [vmem:[%s9 + $0x2c] sm:$0xf]
  %v1129 = vld [vmem:[%s9 + $0x30] sm:$0xf]
  %v1130 = vld [vmem:[%s9 + $0x34] sm:$0xf]
  %v1131 = vld [vmem:[%s9 + $0x38] sm:$0xf]
  %v1132 = vld [vmem:[%s9 + $0x3c] sm:$0xf]
  %v1133 = vld [vmem:[%s10] sm:$0x1]
  %v1135 = vlaneseq
  %v1136 = vshrl.u32 %v1135, 7
  %v1137 = vsub.s32 0, %v1136
  %v1138 = vrot.slane %v1133, %v1137
  %v1156 = vunpack.c.l.b16 %v1117
  %v1157 = vunpack.c.l.b16 %v1118
  %v1158 = vunpack.c.l.b16 %v1119
  %v1159 = vunpack.c.l.b16 %v1120
  %v1160 = vunpack.c.l.b16 %v1121
  %v1161 = vunpack.c.l.b16 %v1122
  %v1162 = vunpack.c.l.b16 %v1123
  %v1163 = vunpack.c.l.b16 %v1124
  %v1164 = vunpack.c.l.b16 %v1125
  %v1165 = vunpack.c.l.b16 %v1126
  %v1166 = vunpack.c.l.b16 %v1127
  %v1167 = vunpack.c.l.b16 %v1128
  %v1168 = vunpack.c.l.b16 %v1129
  %v1169 = vunpack.c.l.b16 %v1130
  %v1170 = vunpack.c.l.b16 %v1131
  %v1171 = vunpack.c.l.b16 %v1132
  %v1172 = vpack.c.b16 %v1157, %v1156
  %v1173 = vpack.c.b16 %v1159, %v1158
  %v1174 = vpack.c.b16 %v1161, %v1160
  %v1175 = vpack.c.b16 %v1163, %v1162
  %v1176 = vpack.c.b16 %v1165, %v1164
  %v1177 = vpack.c.b16 %v1167, %v1166
  %v1178 = vpack.c.b16 %v1169, %v1168
  %v1179 = vpack.c.b16 %v1171, %v1170
  %1188 = vmatprep.subr.bf16.mxu0 0
  %1189 = vmatpush1.bf16.msra.mxu0 %v1172
  %1190 = vmatprep.subr.bf16.mxu0 0
  %1191 = vmatpush1.bf16.msra.mxu0 %v1173
  %1192 = vmatprep.subr.bf16.mxu0 0
  %1193 = vmatpush1.bf16.msra.mxu0 %v1174
  %1194 = vmatprep.subr.bf16.mxu0 0
  %1195 = vmatpush1.bf16.msra.mxu0 %v1175
  %1196 = vmatprep.subr.bf16.mxu0 0
  %1197 = vmatpush1.bf16.msra.mxu0 %v1176
  %1198 = vmatprep.subr.bf16.mxu0 0
  %1199 = vmatpush1.bf16.msra.mxu0 %v1177
  %1200 = vmatprep.subr.bf16.mxu0 0
  %1201 = vmatpush1.bf16.msra.mxu0 %v1178
  %1202 = vmatprep.subr.bf16.mxu0 0
  %1203 = vmatpush1.bf16.msra.mxu0 %v1179
  %1204 = vmatprep.subr.bf16.mxu0 0
  %1205 = vmatpush1.bf16.msra.mxu0 0
  %1206 = vmatprep.subr.bf16.mxu0 0
  %1207 = vmatpush1.bf16.msra.mxu0 0
  %1208 = vmatprep.subr.bf16.mxu0 0
  %1209 = vmatpush1.bf16.msra.mxu0 0
  %1210 = vmatprep.subr.bf16.mxu0 0
  %1211 = vmatpush1.bf16.msra.mxu0 0
  %1212 = vmatprep.subr.bf16.mxu0 0
  %1213 = vmatpush1.bf16.msra.mxu0 0
  %1214 = vmatprep.subr.bf16.mxu0 0
  %1215 = vmatpush1.bf16.msra.mxu0 0
  %1216 = vmatprep.subr.bf16.mxu0 0
  %1217 = vmatpush1.bf16.msra.mxu0 0
  %1218 = vmatprep.subr.bf16.mxu0 0
  %1219 = vmatpush1.bf16.msra.mxu0 0
  %1220 = vmatprep.mubr.bf16.mxu0 0
  %1221 = vmatmul.mubr.bf16.gmra.mrb[0].mxu0 %v1109
  %v1222 = vpop.f32.mrb[0].mxu0
  %v1223 = vadd.f32 %v1138, %v1222
  %v1224 = vpop.f32.mrb[0].mxu0
  %v1225 = vpop.f32.mrb[0].mxu0
  %v1226 = vadd.f32 %v1138, %v1225
  %v1227 = vpop.f32.mrb[0].mxu0
  %1228 = vmatprep.mubr.bf16.mxu0 0
  %1229 = vmatmul.mubr.bf16.gmra.mrb[0].mxu0 %v1110
  %v1230 = vpop.f32.mrb[0].mxu0
  %v1231 = vadd.f32 %v1138, %v1230
  %v1232 = vpop.f32.mrb[0].mxu0
  %v1233 = vpop.f32.mrb[0].mxu0
  %v1234 = vadd.f32 %v1138, %v1233
  %v1235 = vpop.f32.mrb[0].mxu0
  %1236 = vmatprep.mubr.bf16.mxu0 0
  %1237 = vmatmul.mubr.bf16.gmra.mrb[0].mxu0 %v1111
  %v1238 = vpop.f32.mrb[0].mxu0
  %v1239 = vadd.f32 %v1138, %v1238
  %v1240 = vpop.f32.mrb[0].mxu0
  %v1241 = vpop.f32.mrb[0].mxu0
  %v1242 = vadd.f32 %v1138, %v1241
  %v1243 = vpop.f32.mrb[0].mxu0
  %1244 = vmatprep.mubr.bf16.mxu0 0
  %1245 = vmatmul.mubr.bf16.gmra.mrb[0].mxu0 %v1112
  %v1246 = vpop.f32.mrb[0].mxu0
  %v1247 = vadd.f32 %v1138, %v1246
  %v1248 = vpop.f32.mrb[0].mxu0
  %v1249 = vpop.f32.mrb[0].mxu0
  %v1250 = vadd.f32 %v1138, %v1249
  %v1251 = vpop.f32.mrb[0].mxu0
  %1252 = vmatprep.mubr.bf16.mxu0 0
  %1253 = vmatmul.mubr.bf16.gmra.mrb[0].mxu0 %v1113
  %v1254 = vpop.f32.mrb[0].mxu0
  %v1255 = vadd.f32 %v1138, %v1254
  %v1256 = vpop.f32.mrb[0].mxu0
  %v1257 = vpop.f32.mrb[0].mxu0
  %v1258 = vadd.f32 %v1138, %v1257
  %v1259 = vpop.f32.mrb[0].mxu0
  %1260 = vmatprep.mubr.bf16.mxu0 0
  %1261 = vmatmul.mubr.bf16.gmra.mrb[0].mxu0 %v1114
  %v1262 = vpop.f32.mrb[0].mxu0
  %v1263 = vadd.f32 %v1138, %v1262
  %v1264 = vpop.f32.mrb[0].mxu0
  %v1265 = vpop.f32.mrb[0].mxu0
  %v1266 = vadd.f32 %v1138, %v1265
  %v1267 = vpop.f32.mrb[0].mxu0
  %1268 = vmatprep.mubr.bf16.mxu0 0
  %1269 = vmatmul.mubr.bf16.gmra.mrb[0].mxu0 %v1115
  %v1270 = vpop.f32.mrb[0].mxu0
  %v1271 = vadd.f32 %v1138, %v1270
  %v1272 = vpop.f32.mrb[0].mxu0
  %v1273 = vpop.f32.mrb[0].mxu0
  %v1274 = vadd.f32 %v1138, %v1273
  %v1275 = vpop.f32.mrb[0].mxu0
  %1276 = vmatprep.mubr.bf16.mxu0 0
  %1277 = vmatmul.mubr.bf16.gmra.mrb[0].mxu0 %v1116
  %v1278 = vpop.f32.mrb[0].mxu0
  %v1279 = vadd.f32 %v1138, %v1278
  %v1280 = vpop.f32.mrb[0].mxu0
  %v1281 = vpop.f32.mrb[0].mxu0
  %v1282 = vadd.f32 %v1138, %v1281
  %v1283 = vpop.f32.mrb[0].mxu0
  %1284 = vdwg.mxu0
  %1285 = vst [vmem:[%s11] sm:$0xff] %v1223
  %1286 = vst [vmem:[%s11 + $0x8] sm:$0xff] %v1226
  %1287 = vst [vmem:[%s11 + $0x10] sm:$0xff] %v1231
  %1288 = vst [vmem:[%s11 + $0x18] sm:$0xff] %v1234
  %1289 = vst [vmem:[%s11 + $0x20] sm:$0xff] %v1239
  %1290 = vst [vmem:[%s11 + $0x28] sm:$0xff] %v1242
  %1291 = vst [vmem:[%s11 + $0x30] sm:$0xff] %v1247
  %1292 = vst [vmem:[%s11 + $0x38] sm:$0xff] %v1250
  %1293 = vst [vmem:[%s11 + $0x40] sm:$0xff] %v1255
  %1294 = vst [vmem:[%s11 + $0x48] sm:$0xff] %v1258
  %1295 = vst [vmem:[%s11 + $0x50] sm:$0xff] %v1263
  %1296 = vst [vmem:[%s11 + $0x58] sm:$0xff] %v1266
  %1297 = vst [vmem:[%s11 + $0x60] sm:$0xff] %v1271
  %1298 = vst [vmem:[%s11 + $0x68] sm:$0xff] %v1274
  %1299 = vst [vmem:[%s11 + $0x70] sm:$0xff] %v1279
  %1300 = vst [vmem:[%s11 + $0x78] sm:$0xff] %v1282
  // Predicated region
  $region46: #{decoder_forward.1} parent=0 // pred_check
    _
  $region47: #{decoder_forward.1} parent=0 // pred_check_branch
    %1302 = sbr.rel (0) target = $region49
  $region48: #{decoder_forward.1} parent=0 // pred_region
    _
  $region49: #{decoder_forward.1} parent=0 // pred_fallthru
    _
  // Predicated region
  $region50: #{decoder_forward.1} parent=0 // pred_check
    _
  $region51: #{decoder_forward.1} parent=0 // pred_check_branch
    %1304 = sbr.rel (0) target = $region53
  $region52: #{decoder_forward.1} parent=0 // pred_region
    _
  $region53: #{decoder_forward.1} parent=0 // pred_fallthru
    _

</llo_original>
